<compile_context>
chip_gen: v6e
topology: v6e:2x2x1
jax: 0.10.0
libtpu: 0.0.40
codegen_flags: <defaults>
</compile_context>

<pallas_src>
import functools

import jax
import jax.numpy as jnp
from jax.experimental import pallas as pl
from jax.experimental.pallas import tpu as pltpu

LANE = 128  # padded feature width (lane-dense)


def _round_up(x, m):
    return (x + m - 1) // m * m


def _pad2d(w, rows, cols):
    out = jnp.zeros((rows, cols), jnp.float32)
    return out.at[: w.shape[0], : w.shape[1]].set(w.astype(jnp.float32))


def _vmem_capacity_bytes():
    try:
        cap = getattr(pltpu.get_tpu_info(), "vmem_capacity_bytes", None)
        if cap:
            return int(cap)
    except Exception:
        pass
    return 64 * 1024 * 1024  # conservative (v7x-sized) fallback


# ----------------------------- fused Pallas kernel -----------------------------

def fused_sage_kernel(a_ref, invdeg_ref, x_hbm, wl_ref, wr_ref, b_ref,
                      w1_ref, b1_ref, w2_ref, b2_ref,
                      o_ref, h_ref, seed_sem,
                      *, n_real, tile_m, a_resident, final_slot):
    """Grid = (num_layers, num_row_tiles); layer axis outer, row-tile axis inner.

    Step (l, i) computes row-tile i of layer l into the ping-pong slot (l+1)%2:
        out_tile = l2norm( (A[i,:] @ h_prev) * invdeg[i] @ Wl + h_prev[i] @ Wr + b )
    h lives in a bf16 VMEM scratch of shape (2, n_pad, LANE) indexed by layer parity.
    The last grid step runs the global-mean-pool + classifier epilogue.
    """
    l = pl.program_id(0)
    i = pl.program_id(1)
    n_layers = pl.num_programs(0)
    n_tiles = pl.num_programs(1)

    # One-shot seed of layer-0 features from HBM straight into the bf16 ping-pong
    # scratch (X is never kept VMEM-resident as a pipelined input).
    @pl.when((l == 0) & (i == 0))
    def _():
        cp = pltpu.make_async_copy(x_hbm, h_ref.at[0], seed_sem)
        cp.start()
        cp.wait()

    cur = l % 2          # read slot for this layer
    nxt = 1 - cur        # write slot for this layer's output
    row0 = pl.multiple_of(i * tile_m, tile_m)

    # Mean aggregation: one row-slab of the binary bf16 adjacency times the full
    # resident hidden state (MXU, f32 accumulation), then exact f32 1/deg scaling.
    h_prev = h_ref[cur]                                             # (n_pad, LANE) bf16
    if a_resident:
        a_slab = a_ref[pl.ds(row0, tile_m), :]                      # resident A: slice rows
    else:
        a_slab = a_ref[...]                                         # streamed row slab
    agg = jnp.dot(a_slab, h_prev, preferred_element_type=jnp.float32)
    agg = agg * invdeg_ref[pl.ds(row0, tile_m), :]                  # (tile_m, 1) f32

    # Two-dot projection (no lane-axis concat): agg @ Wl + x_self @ Wr + b.
    x_self = h_ref[cur, pl.ds(row0, tile_m), :].astype(jnp.float32)
    out = (jnp.dot(agg, wl_ref[...], preferred_element_type=jnp.float32)
           + jnp.dot(x_self, wr_ref[...], preferred_element_type=jnp.float32)
           + b_ref[...])

    # F.normalize(out, p=2, dim=-1) == out / max(||out||, 1e-12) via rsqrt (EUP slot).
    sumsq = jnp.sum(out * out, axis=-1, keepdims=True)
    out = out * jax.lax.rsqrt(jnp.maximum(sumsq, 1e-24))

    h_ref[nxt, pl.ds(row0, tile_m), :] = out.astype(jnp.bfloat16)

    # --- epilogue: global mean pool over real nodes + Linear->ReLU->(Dropout=id)->Linear ---
    @pl.when((l == n_layers - 1) & (i == n_tiles - 1))
    def _():
        h_fin = h_ref[final_slot].astype(jnp.float32)               # (n_pad, LANE)
        rows = jax.lax.broadcasted_iota(jnp.int32, (h_fin.shape[0], 1), 0)
        valid = (rows < n_real).astype(jnp.float32)                 # mask padded rows
        pooled = jnp.sum(h_fin * valid, axis=0, keepdims=True) * (1.0 / n_real)  # (1, LANE)
        h1 = jnp.dot(pooled, w1_ref[...], preferred_element_type=jnp.float32) + b1_ref[...]
        h1 = jnp.maximum(h1, 0.0)                                   # ReLU
        # TODO(synk): dropout is identity here (eval mode); training-mode dropout
        # would use pltpu.prng_seed + pltpu.stateful_bernoulli.
        o_ref[...] = jnp.dot(h1, w2_ref[...], preferred_element_type=jnp.float32) + b2_ref[...]


# ------------------------------ JAX wrappers ------------------------------

def build_adjacency(edge_index, n_pad):
    """Binary in-edge adjacency (bf16, exact small ints) + per-row f32 inverse in-degree."""
    src, dst = edge_index[0], edge_index[1]
    A = jnp.zeros((n_pad, n_pad), jnp.float32).at[dst, src].add(1.0)
    deg = jnp.sum(A, axis=1, keepdims=True)
    inv_deg = 1.0 / jnp.maximum(deg, 1.0)
    # TODO(synk): for truly sparse graphs, replace the dense adjacency with a CSR
    # neighbor gather driven by PrefetchScalarGridSpec scalar prefetch.
    return A.astype(jnp.bfloat16), inv_deg


@jax.jit
def sage_forward(params, x, edge_index):
    """Full SAGE.forward: stacked SAGEConv, global mean pool, classifier."""
    N, f_in = x.shape
    num_layers = len(params["convs"])
    out_ch = params["classifier"][2].shape[1]

    # --- generation-aware tiling / VMEM budgeting (v7x's 64 MiB is the binding case) ---
    cap = _vmem_capacity_bytes()
    budget = int(cap * 0.6)
    n_pad = _round_up(max(N, 8), 128)
    h_bytes = 2 * n_pad * LANE * 2                  # bf16 ping-pong hidden scratch
    misc = 4 * 1024 * 1024                          # weights, inv-deg, compiler margin
    a_resident = (2 * n_pad * n_pad * 2 + h_bytes + misc) <= budget
    tile_m = 128
    for cand in (1024, 512, 256, 128):              # biggest slab that fits (amortizes ~0.35us/step)
        if n_pad % cand:
            continue
        a_bytes = 2 * n_pad * n_pad * 2 if a_resident else 2 * cand * n_pad * 2
        if a_bytes + h_bytes + misc <= budget:
            tile_m = cand
            break
    n_tiles = n_pad // tile_m
    a_bytes = 2 * n_pad * n_pad * 2 if a_resident else 2 * tile_m * n_pad * 2
    vmem_limit = int(min(cap * 0.85, max(a_bytes + h_bytes + misc + (8 << 20), 32 << 20)))

    A, inv_deg = build_adjacency(edge_index, n_pad)                 # bf16 / f32
    x_pad = jnp.zeros((n_pad, LANE), jnp.bfloat16).at[:N, :f_in].set(x.astype(jnp.bfloat16))

    # Per-layer stacked / zero-padded weights: Wl, Wr -> (L, LANE, LANE), bias (L, 1, LANE).
    wl = jnp.stack([_pad2d(Wl, LANE, LANE) for (Wl, _, _) in params["convs"]])
    wr = jnp.stack([_pad2d(Wr, LANE, LANE) for (_, Wr, _) in params["convs"]])
    bias = jnp.stack([_pad2d(b, 1, LANE) for (_, _, b) in params["convs"]])

    W1, b1, W2, b2 = params["classifier"]
    W1p, b1p = _pad2d(W1, LANE, LANE), _pad2d(b1, 1, LANE)
    W2p, b2p = _pad2d(W2, LANE, LANE), _pad2d(b2, 1, LANE)

    kernel = functools.partial(fused_sage_kernel, n_real=N, tile_m=tile_m,
                               a_resident=a_resident, final_slot=num_layers % 2)

    a_spec = (pl.BlockSpec((n_pad, n_pad), lambda l, i: (0, 0)) if a_resident
              else pl.BlockSpec((tile_m, n_pad), lambda l, i: (i, 0)))
    # TODO(synk): when streaming A, pipeline_mode=pl.Buffered(3) could add prefetch slack.

    out_pad = pl.pallas_call(
        kernel,
        out_shape=jax.ShapeDtypeStruct((1, LANE), jnp.float32),
        grid_spec=pltpu.PrefetchScalarGridSpec(
            num_scalar_prefetch=0,
            grid=(num_layers, n_tiles),
            in_specs=[
                a_spec,                                                    # adjacency (bf16)
                pl.BlockSpec((n_pad, 1), lambda l, i: (0, 0)),             # 1/deg (f32, resident)
                pl.BlockSpec(memory_space=pl.ANY),                         # padded X stays in HBM
                pl.BlockSpec((None, LANE, LANE), lambda l, i: (l, 0, 0)),  # Wl per layer
                pl.BlockSpec((None, LANE, LANE), lambda l, i: (l, 0, 0)),  # Wr per layer
                pl.BlockSpec((None, 1, LANE), lambda l, i: (l, 0, 0)),     # bias per layer
                pl.BlockSpec((LANE, LANE), lambda l, i: (0, 0)),           # W1
                pl.BlockSpec((1, LANE), lambda l, i: (0, 0)),              # b1
                pl.BlockSpec((LANE, LANE), lambda l, i: (0, 0)),           # W2
                pl.BlockSpec((1, LANE), lambda l, i: (0, 0)),              # b2
            ],
            out_specs=pl.BlockSpec((1, LANE), lambda l, i: (0, 0)),
            scratch_shapes=[pltpu.VMEM((2, n_pad, LANE), jnp.bfloat16),    # ping-pong hidden state
                            pltpu.SemaphoreType.DMA(())],                  # X seed DMA semaphore
        ),
        compiler_params=pltpu.CompilerParams(
            # Hidden state is carried through VMEM scratch across layers and feeds the
            # pooled epilogue, so both grid axes stay sequential.
            # TODO(synk): v7x dual-TC sharding of the row-tile axis via core_map/VMEM_SHARED.
            dimension_semantics=("arbitrary", "arbitrary"),
            vmem_limit_bytes=vmem_limit,
        ),
    )(A, inv_deg, x_pad, wl, wr, bias, W1p, b1p, W2p, b2p)

    return out_pad[:, :out_ch]


def init_params(key, in_channels, hidden_channels, num_layers, out_channels):
    """Deterministic synthetic parameters matching SAGE.__init__ (reduce_channels < 0).
    Weights stored as [F_in, F_out] (kernel computes x @ W, i.e. PyTorch's x @ W.T)."""
    keys = jax.random.split(key, 3 * num_layers + 4)
    convs = []
    k = 0
    fin = in_channels
    for _ in range(num_layers):
        Wl = 0.1 * jax.random.normal(keys[k], (fin, hidden_channels), jnp.float32); k += 1
        Wr = 0.1 * jax.random.normal(keys[k], (fin, hidden_channels), jnp.float32); k += 1
        b = 0.1 * jax.random.normal(keys[k], (1, hidden_channels), jnp.float32); k += 1
        convs.append((Wl, Wr, b))
        fin = hidden_channels
    W1 = 0.1 * jax.random.normal(keys[k], (hidden_channels, hidden_channels), jnp.float32); k += 1
    b1 = 0.1 * jax.random.normal(keys[k], (1, hidden_channels), jnp.float32); k += 1
    W2 = 0.1 * jax.random.normal(keys[k], (hidden_channels, out_channels), jnp.float32); k += 1
    b2 = 0.1 * jax.random.normal(keys[k], (1, out_channels), jnp.float32); k += 1
    return {"convs": convs, "classifier": (W1, b1, W2, b2)}


# --------------------------------- main ------------------------------------

if __name__ == "__main__":
    IN_CHANNELS = 4
    HIDDEN = 32
    NUM_LAYERS = 2
    OUT_CHANNELS = 1
    N_NODES = 16

    key = jax.random.PRNGKey(0)
    k_params, k_x = jax.random.split(key)

    params = init_params(k_params, IN_CHANNELS, HIDDEN, NUM_LAYERS, OUT_CHANNELS)

    # Node features [N, F]
    x = jax.random.normal(k_x, (N_NODES, IN_CHANNELS), jnp.float32)

    # Deterministic edge_index (2, E): ring in both directions + a few chords.
    src = list(range(N_NODES)) + [(i + 1) % N_NODES for i in range(N_NODES)] + [0, 3, 7, 11]
    dst = [(i + 1) % N_NODES for i in range(N_NODES)] + list(range(N_NODES)) + [8, 12, 2, 5]
    edge_index = jnp.array([src, dst], dtype=jnp.int32)

    out = sage_forward(params, x, edge_index)
    jax.block_until_ready(out)
    assert out.shape == (1, OUT_CHANNELS)
    print("KERNEL_OK")
</pallas_src>

<mosaic_0001>
module attributes {stable_mosaic.version = 11 : i64} {
  func.func @fused_sage_kernel(%arg0: i32, %arg1: i32, %arg2: memref<128x128xbf16, #tpu.memory_space<vmem>>, %arg3: memref<128x1xf32, #tpu.memory_space<vmem>>, %arg4: memref<128x128xbf16, #tpu.memory_space<any>>, %arg5: memref<1x128x128xf32, #tpu.memory_space<vmem>>, %arg6: memref<1x128x128xf32, #tpu.memory_space<vmem>>, %arg7: memref<1x1x128xf32, #tpu.memory_space<vmem>>, %arg8: memref<128x128xf32, #tpu.memory_space<vmem>>, %arg9: memref<1x128xf32, #tpu.memory_space<vmem>>, %arg10: memref<128x128xf32, #tpu.memory_space<vmem>>, %arg11: memref<1x128xf32, #tpu.memory_space<vmem>>, %arg12: memref<1x128xf32, #tpu.memory_space<vmem>>, %arg13: memref<2x128x128xbf16, #tpu.memory_space<vmem>>, %arg14: memref<!tpu.dma_semaphore, #tpu.memory_space<semaphore_mem>>) attributes {dimension_semantics = [#tpu.dimension_semantics<arbitrary>, #tpu.dimension_semantics<arbitrary>], iteration_bounds = array<i64: 2, 1>, scalar_prefetch = 0 : i64, scratch_operands = 2 : i64, tpu.core_type = #tpu.core_type<tc>, window_params = [{pipeline_mode = #tpu.pipeline_mode<synchronous>, transform_indices = @transform_0, window_bounds = array<i64: 128, 128>}, {pipeline_mode = #tpu.pipeline_mode<synchronous>, transform_indices = @transform_1, window_bounds = array<i64: 128, 1>}, {}, {transform_indices = @transform_3, window_bounds = array<i64: 1, 128, 128>}, {transform_indices = @transform_4, window_bounds = array<i64: 1, 128, 128>}, {transform_indices = @transform_5, window_bounds = array<i64: 1, 1, 128>}, {pipeline_mode = #tpu.pipeline_mode<synchronous>, transform_indices = @transform_6, window_bounds = array<i64: 128, 128>}, {pipeline_mode = #tpu.pipeline_mode<synchronous>, transform_indices = @transform_7, window_bounds = array<i64: 1, 128>}, {pipeline_mode = #tpu.pipeline_mode<synchronous>, transform_indices = @transform_8, window_bounds = array<i64: 128, 128>}, {pipeline_mode = #tpu.pipeline_mode<synchronous>, transform_indices = @transform_9, window_bounds = array<i64: 1, 128>}, {pipeline_mode = #tpu.pipeline_mode<synchronous>, transform_indices = @transform_10, window_bounds = array<i64: 1, 128>}]} {
    %c0_i32 = arith.constant 0 : i32
    %0 = arith.cmpi eq, %arg0, %c0_i32 : i32
    %c0_i32_0 = arith.constant 0 : i32
    %1 = arith.cmpi eq, %arg1, %c0_i32_0 : i32
    %2 = arith.andi %0, %1 : i1
    %3 = arith.extui %2 : i1 to i32
    %c0_i32_1 = arith.constant 0 : i32
    %4 = arith.cmpi ne, %3, %c0_i32_1 : i32
    scf.if %4 {
      %c0_i32_28 = arith.constant 0 : i32
      %c0_i32_29 = arith.constant 0 : i32
      %c0_i32_30 = arith.constant 0 : i32
      %63 = tpu.memref_slice %arg13[%c0_i32_28, %c0_i32_29, %c0_i32_30] : memref<2x128x128xbf16, #tpu.memory_space<vmem>> -> memref<1x128x128xbf16, #tpu.memory_space<vmem>>
      %64 = tpu.memref_squeeze %63 : memref<1x128x128xbf16, #tpu.memory_space<vmem>> -> memref<128x128xbf16, #tpu.memory_space<vmem>>
      tpu.enqueue_dma source(%arg4 : memref<128x128xbf16, #tpu.memory_space<any>>) target(%64 : memref<128x128xbf16, #tpu.memory_space<vmem>>) target_semaphore(%arg14 : memref<!tpu.dma_semaphore, #tpu.memory_space<semaphore_mem>>)
      %c0_i32_31 = arith.constant 0 : i32
      %c0_i32_32 = arith.constant 0 : i32
      %c0_i32_33 = arith.constant 0 : i32
      %65 = tpu.memref_slice %arg13[%c0_i32_31, %c0_i32_32, %c0_i32_33] : memref<2x128x128xbf16, #tpu.memory_space<vmem>> -> memref<1x128x128xbf16, #tpu.memory_space<vmem>>
      %66 = tpu.memref_squeeze %65 : memref<1x128x128xbf16, #tpu.memory_space<vmem>> -> memref<128x128xbf16, #tpu.memory_space<vmem>>
      tpu.wait_dma2 semaphore(%arg14 : memref<!tpu.dma_semaphore, #tpu.memory_space<semaphore_mem>>) src(%arg4 : memref<128x128xbf16, #tpu.memory_space<any>>) dst(%66 : memref<128x128xbf16, #tpu.memory_space<vmem>>)
    } else {
    }
    %c2_i32 = arith.constant 2 : i32
    %c0_i32_2 = arith.constant 0 : i32
    %5 = arith.cmpi eq, %c2_i32, %c0_i32_2 : i32
    %c1_i32 = arith.constant 1 : i32
    %6 = arith.select %5, %c1_i32, %c2_i32 : i32
    %7 = arith.remsi %arg0, %6 : i32
    %c0_i32_3 = arith.constant 0 : i32
    %8 = arith.cmpi ne, %7, %c0_i32_3 : i32
    %c0_i32_4 = arith.constant 0 : i32
    %9 = arith.cmpi slt, %7, %c0_i32_4 : i32
    %c0_i32_5 = arith.constant 0 : i32
    %10 = arith.cmpi slt, %6, %c0_i32_5 : i32
    %11 = arith.xori %9, %10 : i1
    %12 = arith.andi %11, %8 : i1
    %13 = arith.addi %7, %6 : i32
    %14 = arith.select %12, %13, %7 : i32
    %c1_i32_6 = arith.constant 1 : i32
    %15 = arith.subi %c1_i32_6, %14 : i32
    %c128_i32 = arith.constant 128 : i32
    %16 = arith.muli %arg1, %c128_i32 : i32
    %17 = tpu.assume_multiple %16, 128 : i32
    %18 = arith.index_cast %14 : i32 to index
    %c0 = arith.constant 0 : index
    %c0_7 = arith.constant 0 : index
    %19 = vector.load %arg13[%18, %c0, %c0_7] : memref<2x128x128xbf16, #tpu.memory_space<vmem>>, vector<1x128x128xbf16>
    %20 = vector.shape_cast %19 : vector<1x128x128xbf16> to vector<128x128xbf16>
    %21 = arith.index_cast %17 : i32 to index
    %c0_8 = arith.constant 0 : index
    %22 = vector.load %arg2[%21, %c0_8] : memref<128x128xbf16, #tpu.memory_space<vmem>>, vector<128x128xbf16>
    %cst = arith.constant dense<0.000000e+00> : vector<128x128xf32>
    %23 = tpu.matmul %22, %20, %cst {dimension_numbers = #tpu.dot_dimension_numbers<[1], [0], [0], [1], [0, 0, 1, 1], [], []>} : vector<128x128xbf16>, vector<128x128xbf16>, vector<128x128xf32> -> vector<128x128xf32>
    %24 = arith.index_cast %17 : i32 to index
    %c0_9 = arith.constant 0 : index
    %25 = vector.load %arg3[%24, %c0_9] : memref<128x1xf32, #tpu.memory_space<vmem>>, vector<128x1xf32>
    %26 = vector.broadcast %25 : vector<128x1xf32> to vector<128x128xf32>
    %27 = arith.mulf %23, %26 : vector<128x128xf32>
    %28 = arith.index_cast %14 : i32 to index
    %29 = arith.index_cast %17 : i32 to index
    %c0_10 = arith.constant 0 : index
    %30 = vector.load %arg13[%28, %29, %c0_10] : memref<2x128x128xbf16, #tpu.memory_space<vmem>>, vector<1x128x128xbf16>
    %31 = vector.shape_cast %30 : vector<1x128x128xbf16> to vector<128x128xbf16>
    %32 = arith.extf %31 : vector<128x128xbf16> to vector<128x128xf32>
    %c0_11 = arith.constant 0 : index
    %c0_12 = arith.constant 0 : index
    %c0_13 = arith.constant 0 : index
    %33 = vector.load %arg5[%c0_11, %c0_12, %c0_13] : memref<1x128x128xf32, #tpu.memory_space<vmem>>, vector<1x128x128xf32>
    %34 = vector.shape_cast %33 : vector<1x128x128xf32> to vector<128x128xf32>
    %cst_14 = arith.constant dense<0.000000e+00> : vector<128x128xf32>
    %35 = tpu.matmul %27, %34, %cst_14 {dimension_numbers = #tpu.dot_dimension_numbers<[1], [0], [0], [1], [0, 0, 1, 1], [], []>} : vector<128x128xf32>, vector<128x128xf32>, vector<128x128xf32> -> vector<128x128xf32>
    %c0_15 = arith.constant 0 : index
    %c0_16 = arith.constant 0 : index
    %c0_17 = arith.constant 0 : index
    %36 = vector.load %arg6[%c0_15, %c0_16, %c0_17] : memref<1x128x128xf32, #tpu.memory_space<vmem>>, vector<1x128x128xf32>
    %37 = vector.shape_cast %36 : vector<1x128x128xf32> to vector<128x128xf32>
    %cst_18 = arith.constant dense<0.000000e+00> : vector<128x128xf32>
    %38 = tpu.matmul %32, %37, %cst_18 {dimension_numbers = #tpu.dot_dimension_numbers<[1], [0], [0], [1], [0, 0, 1, 1], [], []>} : vector<128x128xf32>, vector<128x128xf32>, vector<128x128xf32> -> vector<128x128xf32>
    %39 = arith.addf %35, %38 : vector<128x128xf32>
    %c0_19 = arith.constant 0 : index
    %c0_20 = arith.constant 0 : index
    %c0_21 = arith.constant 0 : index
    %40 = vector.load %arg7[%c0_19, %c0_20, %c0_21] : memref<1x1x128xf32, #tpu.memory_space<vmem>>, vector<1x1x128xf32>
    %41 = vector.shape_cast %40 : vector<1x1x128xf32> to vector<1x128xf32>
    %42 = vector.broadcast %41 : vector<1x128xf32> to vector<128x128xf32>
    %43 = arith.addf %39, %42 : vector<128x128xf32>
    %44 = arith.mulf %43, %43 : vector<128x128xf32>
    %cst_22 = arith.constant dense<0.000000e+00> : vector<128xf32>
    %45 = vector.multi_reduction <add>, %44, %cst_22 [1] : vector<128x128xf32> to vector<128xf32>
    %46 = vector.shape_cast %45 : vector<128xf32> to vector<128x1xf32>
    %cst_23 = arith.constant 1.000000e-24 : f32
    %47 = vector.broadcast %cst_23 : f32 to vector<128x1xf32>
    %48 = arith.maximumf %46, %47 : vector<128x1xf32>
    %49 = math.rsqrt %48 : vector<128x1xf32>
    %50 = vector.broadcast %49 : vector<128x1xf32> to vector<128x128xf32>
    %51 = arith.mulf %43, %50 : vector<128x128xf32>
    %52 = arith.truncf %51 : vector<128x128xf32> to vector<128x128xbf16>
    %53 = arith.index_cast %15 : i32 to index
    %54 = arith.index_cast %17 : i32 to index
    %c0_24 = arith.constant 0 : index
    %55 = vector.load %arg13[%53, %54, %c0_24] : memref<2x128x128xbf16, #tpu.memory_space<vmem>>, vector<1x128x128xbf16>
    %56 = vector.shape_cast %55 : vector<1x128x128xbf16> to vector<128x128xbf16>
    %57 = vector.shape_cast %52 : vector<128x128xbf16> to vector<1x128x128xbf16>
    tpu.vector_store %arg13[%53, %54, %c0_24], %57 {strides = array<i32>} : memref<2x128x128xbf16, #tpu.memory_space<vmem>>, vector<1x128x128xbf16>,
    %c1_i32_25 = arith.constant 1 : i32
    %58 = arith.cmpi eq, %arg0, %c1_i32_25 : i32
    %c0_i32_26 = arith.constant 0 : i32
    %59 = arith.cmpi eq, %arg1, %c0_i32_26 : i32
    %60 = arith.andi %58, %59 : i1
    %61 = arith.extui %60 : i1 to i32
    %c0_i32_27 = arith.constant 0 : i32
    %62 = arith.cmpi ne, %61, %c0_i32_27 : i32
    scf.if %62 {
      %c0_28 = arith.constant 0 : index
      %c0_29 = arith.constant 0 : index
      %c0_30 = arith.constant 0 : index
      %63 = vector.load %arg13[%c0_28, %c0_29, %c0_30] : memref<2x128x128xbf16, #tpu.memory_space<vmem>>, vector<1x128x128xbf16>
      %64 = vector.shape_cast %63 : vector<1x128x128xbf16> to vector<128x128xbf16>
      %65 = arith.extf %64 : vector<128x128xbf16> to vector<128x128xf32>
      %66 = tpu.iota {dimensions = array<i32: 0>} : vector<128x1xi32>
      %c16_i32 = arith.constant 16 : i32
      %67 = vector.broadcast %c16_i32 : i32 to vector<128x1xi32>
      %68 = arith.cmpi slt, %66, %67 : vector<128x1xi32>
      %69 = arith.extui %68 : vector<128x1xi1> to vector<128x1xi32>
      %70 = arith.sitofp %69 : vector<128x1xi32> to vector<128x1xf32>
      %71 = vector.broadcast %70 : vector<128x1xf32> to vector<128x128xf32>
      %72 = arith.mulf %65, %71 : vector<128x128xf32>
      %cst_31 = arith.constant dense<0.000000e+00> : vector<128xf32>
      %73 = vector.multi_reduction <add>, %72, %cst_31 [0] : vector<128x128xf32> to vector<128xf32>
      %74 = vector.shape_cast %73 : vector<128xf32> to vector<1x128xf32>
      %cst_32 = arith.constant 6.250000e-02 : f32
      %75 = vector.broadcast %cst_32 : f32 to vector<1x128xf32>
      %76 = arith.mulf %74, %75 : vector<1x128xf32>
      %c0_33 = arith.constant 0 : index
      %c0_34 = arith.constant 0 : index
      %77 = vector.load %arg8[%c0_33, %c0_34] : memref<128x128xf32, #tpu.memory_space<vmem>>, vector<128x128xf32>
      %cst_35 = arith.constant dense<0.000000e+00> : vector<1x128xf32>
      %78 = tpu.matmul %76, %77, %cst_35 {dimension_numbers = #tpu.dot_dimension_numbers<[1], [0], [0], [1], [0, 0, 1, 1], [], []>} : vector<1x128xf32>, vector<128x128xf32>, vector<1x128xf32> -> vector<1x128xf32>
      %c0_36 = arith.constant 0 : index
      %c0_37 = arith.constant 0 : index
      %79 = vector.load %arg9[%c0_36, %c0_37] : memref<1x128xf32, #tpu.memory_space<vmem>>, vector<1x128xf32>
      %80 = arith.addf %78, %79 : vector<1x128xf32>
      %cst_38 = arith.constant 0.000000e+00 : f32
      %81 = vector.broadcast %cst_38 : f32 to vector<1x128xf32>
      %82 = arith.maximumf %80, %81 : vector<1x128xf32>
      %c0_39 = arith.constant 0 : index
      %c0_40 = arith.constant 0 : index
      %83 = vector.load %arg10[%c0_39, %c0_40] : memref<128x128xf32, #tpu.memory_space<vmem>>, vector<128x128xf32>
      %cst_41 = arith.constant dense<0.000000e+00> : vector<1x128xf32>
      %84 = tpu.matmul %82, %83, %cst_41 {dimension_numbers = #tpu.dot_dimension_numbers<[1], [0], [0], [1], [0, 0, 1, 1], [], []>} : vector<1x128xf32>, vector<128x128xf32>, vector<1x128xf32> -> vector<1x128xf32>
      %c0_42 = arith.constant 0 : index
      %c0_43 = arith.constant 0 : index
      %85 = vector.load %arg11[%c0_42, %c0_43] : memref<1x128xf32, #tpu.memory_space<vmem>>, vector<1x128xf32>
      %86 = arith.addf %84, %85 : vector<1x128xf32>
      %c0_44 = arith.constant 0 : index
      %c0_45 = arith.constant 0 : index
      %87 = vector.load %arg12[%c0_44, %c0_45] : memref<1x128xf32, #tpu.memory_space<vmem>>, vector<1x128xf32>
      tpu.vector_store %arg12[%c0_44, %c0_45], %86 {strides = array<i32>} : memref<1x128xf32, #tpu.memory_space<vmem>>, vector<1x128xf32>,
    } else {
    }
    return
  }
  func.func @transform_0(%arg0: i32, %arg1: i32) -> (i32, i32) {
    %c0_i32 = arith.constant 0 : i32
    %c0_i32_0 = arith.constant 0 : i32
    %c0_i32_1 = arith.constant 0 : i32
    return %c0_i32, %c0_i32_0 : i32, i32
  }
  func.func @transform_1(%arg0: i32, %arg1: i32) -> (i32, i32) {
    %c0_i32 = arith.constant 0 : i32
    %c0_i32_0 = arith.constant 0 : i32
    %c0_i32_1 = arith.constant 0 : i32
    return %c0_i32, %c0_i32_0 : i32, i32
  }
  func.func @transform_3(%arg0: i32, %arg1: i32) -> (i32, i32, i32) {
    %c0_i32 = arith.constant 0 : i32
    %c0_i32_0 = arith.constant 0 : i32
    %c0_i32_1 = arith.constant 0 : i32
    return %arg0, %c0_i32, %c0_i32_0 : i32, i32, i32
  }
  func.func @transform_4(%arg0: i32, %arg1: i32) -> (i32, i32, i32) {
    %c0_i32 = arith.constant 0 : i32
    %c0_i32_0 = arith.constant 0 : i32
    %c0_i32_1 = arith.constant 0 : i32
    return %arg0, %c0_i32, %c0_i32_0 : i32, i32, i32
  }
  func.func @transform_5(%arg0: i32, %arg1: i32) -> (i32, i32, i32) {
    %c0_i32 = arith.constant 0 : i32
    %c0_i32_0 = arith.constant 0 : i32
    %c0_i32_1 = arith.constant 0 : i32
    return %arg0, %c0_i32, %c0_i32_0 : i32, i32, i32
  }
  func.func @transform_6(%arg0: i32, %arg1: i32) -> (i32, i32) {
    %c0_i32 = arith.constant 0 : i32
    %c0_i32_0 = arith.constant 0 : i32
    %c0_i32_1 = arith.constant 0 : i32
    return %c0_i32, %c0_i32_0 : i32, i32
  }
  func.func @transform_7(%arg0: i32, %arg1: i32) -> (i32, i32) {
    %c0_i32 = arith.constant 0 : i32
    %c0_i32_0 = arith.constant 0 : i32
    %c0_i32_1 = arith.constant 0 : i32
    return %c0_i32, %c0_i32_0 : i32, i32
  }
  func.func @transform_8(%arg0: i32, %arg1: i32) -> (i32, i32) {
    %c0_i32 = arith.constant 0 : i32
    %c0_i32_0 = arith.constant 0 : i32
    %c0_i32_1 = arith.constant 0 : i32
    return %c0_i32, %c0_i32_0 : i32, i32
  }
  func.func @transform_9(%arg0: i32, %arg1: i32) -> (i32, i32) {
    %c0_i32 = arith.constant 0 : i32
    %c0_i32_0 = arith.constant 0 : i32
    %c0_i32_1 = arith.constant 0 : i32
    return %c0_i32, %c0_i32_0 : i32, i32
  }
  func.func @transform_10(%arg0: i32, %arg1: i32) -> (i32, i32) {
    %c0_i32 = arith.constant 0 : i32
    %c0_i32_0 = arith.constant 0 : i32
    %c0_i32_1 = arith.constant 0 : i32
    return %c0_i32, %c0_i32_0 : i32, i32
  }
}

</mosaic_0001>

<llo_original>
// kernel: sage_forward.1
$region0: #{sage_forward.1}
  #allocation0 [shape = 'u32[]', space=smem, size = 0x4, offset = 0x4, fixed_abs, tag = 'smem constant byte address 0x4 - core index']
  #allocation1 [shape = 'u32[144,128]{1,0:T(1,128)}', space=vmem, size = 0x12000, scoped, tag = 'internal scratch']
  #allocation2 [shape = 'bf16[2,128,128]{2,1,0:T(8,128)(2,1)}', space=vmem, size = 0x10000, scoped, tag = 'scratch operand']
  #allocation3 [shape = 's32[1]{0}', space=sflag, size = 0x4, scoped, tag = 'scratch operand']
  #allocation6 [shape = 's32[]', space=sflag, size = 0x4, offset = 0, fixed_abs, tag = 'sflag constant byte address 0x0 - dummy sync flag']
  %s0 = inlined_call_operand.vmem [shape: bf16[128,128], index: 0, kind: input, shape index: {}]
  %s1 = inlined_call_operand.vmem [shape: f32[128,1], index: 1, kind: input, shape index: {}]
  %s2 = inlined_call_operand.vmem [shape: bf16[128,128], index: 2, kind: input, shape index: {}]
  %s3 = inlined_call_operand.vmem [shape: f32[2,128,128], index: 3, kind: input, shape index: {}]
  %s4 = inlined_call_operand.vmem [shape: f32[2,128,128], index: 4, kind: input, shape index: {}]
  %s5 = inlined_call_operand.vmem [shape: f32[2,1,128], index: 5, kind: input, shape index: {}]
  %s6 = inlined_call_operand.vmem [shape: f32[128,128], index: 6, kind: input, shape index: {}]
  %s7 = inlined_call_operand.vmem [shape: f32[1,128], index: 7, kind: input, shape index: {}]
  %s8 = inlined_call_operand.vmem [shape: f32[128,128], index: 8, kind: input, shape index: {}]
  %s9 = inlined_call_operand.vmem [shape: f32[1,128], index: 9, kind: input, shape index: {}]
  %s10 = inlined_call_operand.hbm [shape: f32[1,128], index: 10, kind: output, shape index: {}]
  %s11 = sld [smem:[#allocation0]]
  $region111: #{sage_forward.1} parent=0
    _
  %s13 = ssub.s32 1, %s11
  %s14 = scalar_select 0, %s13, %s11
  $region1: #{sage_forward.1} parent=0
    #allocation4 [shape = 'u8[512]{0}', space=vmem, size = 0x400, scoped, tag = 'output window, operand 0, single buffered']
    #allocation5 [shape = 's32[2]{0}', space=sflag, size = 0x8, scoped, tag = 'scoped memory for sage_forward.1']
    %15 = vsyncpa [#allocation5], 0
    loop: start=0, step=1, limit=4
    $region2: #{sage_forward.1} parent=1 // loop_pre_header
      _
    $region3: #{sage_forward.1} parent=1 // loop_header
      %s17 = sphi 0, %s21
      %p18 = scmp.ge.s32.totalorder %s17, 4
      %s24 = sphi 0, %s36
      %s25 = sphi 0, %s32
      %s26 = sphi 0, %s24
      %s27 = sphi 0, %s25
      %s28 = sphi 0, %s26
      %s29 = sphi 0, %s27
      %s37 = sphi 0, %s37
      %s39 = sphi 0, %s37
      %s40 = sphi 0, %s39
      %s54 = sphi 0, %s40
      %s58 = sphi 0, %s58
      %s60 = sphi 0, %s58
      %s61 = sphi 0, %s60
      %s75 = sphi 0, %s61
      %s81 = sphi 0, %s83
      %s84 = sphi 0, %s81
      %s85 = sphi 0, %s84
      %s101 = sphi 0, %s85
      %s107 = sphi 0, %s109
      %s110 = sphi 0, %s107
      %s111 = sphi 0, %s110
      %s127 = sphi 0, %s111
      %s133 = sphi 0, %s135
      %s136 = sphi 0, %s133
      %s137 = sphi 0, %s136
      %s153 = sphi 0, %s137
      %s157 = sphi 0, %s157
      %s159 = sphi 0, %s157
      %s160 = sphi 0, %s159
      %s174 = sphi 0, %s160
      %s178 = sphi 0, %s178
      %s180 = sphi 0, %s178
      %s181 = sphi 0, %s180
      %s195 = sphi 0, %s181
      %s199 = sphi 0, %s199
      %s201 = sphi 0, %s199
      %s202 = sphi 0, %s201
      %s216 = sphi 0, %s202
      %s220 = sphi 0, %s220
      %s222 = sphi 0, %s220
      %s223 = sphi 0, %s222
      %s237 = sphi 0, %s223
      %s241 = sphi 0, %s241
      %s243 = sphi 0, %s241
      %s244 = sphi 0, %s243
      %s258 = sphi 0, %s244
    $region4: #{sage_forward.1} parent=1 // loop_header_branch
      %20 = sbr.rel (%p18) target = $region8
    $region5: #{sage_forward.1} parent=1 // loop_body
      %s22 = ssub.s32 %s17, 1
      %s23 = ssub.s32 %s17, 2
      %s30 = sadd.s32 1, %s25
      %p31 = scmp.ge.s32.totalorder %s30, 1
      %s32 = scalar_select %p31, 0, %s30
      %s33 = sadd.s32 1, %s24
      %s34 = scalar_select %p31, %s33, %s24
      %p35 = scmp.ge.s32.totalorder %s34, 2
      %s36 = scalar_select %p35, 0, %s34
      %s38 = sadd.s32 %s37, 1
      %p41 = scmp.eq.s32.totalorder %s17, 1
      %p42 = scmp.ne.s32.totalorder %s37, %s39
      %p43 = scmp.eq.s32.totalorder %s17, 0
      %p44 = por %p42, %p43
      %p45 = scmp.ne.s32.totalorder %s37, %s39
      %p46 = scmp.eq.s32.totalorder %s22, 1
      %p47 = por %p45, %p46
      %p48 = scmp.ne.s32.totalorder %s39, %s40
      %p49 = scmp.eq.s32.totalorder %s22, 0
      %p50 = por %p48, %p49
      %p51 = scmp.ne.s32.totalorder %s39, %s40
      %p52 = scmp.eq.s32.totalorder %s23, 1
      %p53 = por %p51, %p52
      %p55 = scmp.ne.s32.totalorder %s40, %s54
      %p56 = scmp.eq.s32.totalorder %s23, 0
      %p57 = por %p55, %p56
      %s59 = sadd.s32 %s58, 1
      %p62 = scmp.eq.s32.totalorder %s17, 1
      %p63 = scmp.ne.s32.totalorder %s58, %s60
      %p64 = scmp.eq.s32.totalorder %s17, 0
      %p65 = por %p63, %p64
      %p66 = scmp.ne.s32.totalorder %s58, %s60
      %p67 = scmp.eq.s32.totalorder %s22, 1
      %p68 = por %p66, %p67
      %p69 = scmp.ne.s32.totalorder %s60, %s61
      %p70 = scmp.eq.s32.totalorder %s22, 0
      %p71 = por %p69, %p70
      %p72 = scmp.ne.s32.totalorder %s60, %s61
      %p73 = scmp.eq.s32.totalorder %s23, 1
      %p74 = por %p72, %p73
      %p76 = scmp.ne.s32.totalorder %s61, %s75
      %p77 = scmp.eq.s32.totalorder %s23, 0
      %p78 = por %p76, %p77
      %s79 = ssub.s32 %s24, %s36
      %p80 = scmp.eq.s32.totalorder %s79, 0
      %s82 = sadd.s32 %s81, 1
      %s83 = scalar_select %p80, %s81, %s82
      %p86 = pneg %p80
      %p87 = scmp.eq.s32.totalorder %s17, 1
      %p88 = por %p86, %p87
      %p89 = scmp.ne.s32.totalorder %s81, %s84
      %p90 = scmp.eq.s32.totalorder %s17, 0
      %p91 = por %p89, %p90
      %p92 = scmp.ne.s32.totalorder %s81, %s84
      %p93 = scmp.eq.s32.totalorder %s22, 1
      %p94 = por %p92, %p93
      %p95 = scmp.ne.s32.totalorder %s84, %s85
      %p96 = scmp.eq.s32.totalorder %s22, 0
      %p97 = por %p95, %p96
      %p98 = scmp.ne.s32.totalorder %s84, %s85
      %p99 = scmp.eq.s32.totalorder %s23, 1
      %p100 = por %p98, %p99
      %p102 = scmp.ne.s32.totalorder %s85, %s101
      %p103 = scmp.eq.s32.totalorder %s23, 0
      %p104 = por %p102, %p103
      %s105 = ssub.s32 %s24, %s36
      %p106 = scmp.eq.s32.totalorder %s105, 0
      %s108 = sadd.s32 %s107, 1
      %s109 = scalar_select %p106, %s107, %s108
      %p112 = pneg %p106
      %p113 = scmp.eq.s32.totalorder %s17, 1
      %p114 = por %p112, %p113
      %p115 = scmp.ne.s32.totalorder %s107, %s110
      %p116 = scmp.eq.s32.totalorder %s17, 0
      %p117 = por %p115, %p116
      %p118 = scmp.ne.s32.totalorder %s107, %s110
      %p119 = scmp.eq.s32.totalorder %s22, 1
      %p120 = por %p118, %p119
      %p121 = scmp.ne.s32.totalorder %s110, %s111
      %p122 = scmp.eq.s32.totalorder %s22, 0
      %p123 = por %p121, %p122
      %p124 = scmp.ne.s32.totalorder %s110, %s111
      %p125 = scmp.eq.s32.totalorder %s23, 1
      %p126 = por %p124, %p125
      %p128 = scmp.ne.s32.totalorder %s111, %s127
      %p129 = scmp.eq.s32.totalorder %s23, 0
      %p130 = por %p128, %p129
      %s131 = ssub.s32 %s24, %s36
      %p132 = scmp.eq.s32.totalorder %s131, 0
      %s134 = sadd.s32 %s133, 1
      %s135 = scalar_select %p132, %s133, %s134
      %p138 = pneg %p132
      %p139 = scmp.eq.s32.totalorder %s17, 1
      %p140 = por %p138, %p139
      %p141 = scmp.ne.s32.totalorder %s133, %s136
      %p142 = scmp.eq.s32.totalorder %s17, 0
      %p143 = por %p141, %p142
      %p144 = scmp.ne.s32.totalorder %s133, %s136
      %p145 = scmp.eq.s32.totalorder %s22, 1
      %p146 = por %p144, %p145
      %p147 = scmp.ne.s32.totalorder %s136, %s137
      %p148 = scmp.eq.s32.totalorder %s22, 0
      %p149 = por %p147, %p148
      %p150 = scmp.ne.s32.totalorder %s136, %s137
      %p151 = scmp.eq.s32.totalorder %s23, 1
      %p152 = por %p150, %p151
      %p154 = scmp.ne.s32.totalorder %s137, %s153
      %p155 = scmp.eq.s32.totalorder %s23, 0
      %p156 = por %p154, %p155
      %s158 = sadd.s32 %s157, 1
      %p161 = scmp.eq.s32.totalorder %s17, 1
      %p162 = scmp.ne.s32.totalorder %s157, %s159
      %p163 = scmp.eq.s32.totalorder %s17, 0
      %p164 = por %p162, %p163
      %p165 = scmp.ne.s32.totalorder %s157, %s159
      %p166 = scmp.eq.s32.totalorder %s22, 1
      %p167 = por %p165, %p166
      %p168 = scmp.ne.s32.totalorder %s159, %s160
      %p169 = scmp.eq.s32.totalorder %s22, 0
      %p170 = por %p168, %p169
      %p171 = scmp.ne.s32.totalorder %s159, %s160
      %p172 = scmp.eq.s32.totalorder %s23, 1
      %p173 = por %p171, %p172
      %p175 = scmp.ne.s32.totalorder %s160, %s174
      %p176 = scmp.eq.s32.totalorder %s23, 0
      %p177 = por %p175, %p176
      %s179 = sadd.s32 %s178, 1
      %p182 = scmp.eq.s32.totalorder %s17, 1
      %p183 = scmp.ne.s32.totalorder %s178, %s180
      %p184 = scmp.eq.s32.totalorder %s17, 0
      %p185 = por %p183, %p184
      %p186 = scmp.ne.s32.totalorder %s178, %s180
      %p187 = scmp.eq.s32.totalorder %s22, 1
      %p188 = por %p186, %p187
      %p189 = scmp.ne.s32.totalorder %s180, %s181
      %p190 = scmp.eq.s32.totalorder %s22, 0
      %p191 = por %p189, %p190
      %p192 = scmp.ne.s32.totalorder %s180, %s181
      %p193 = scmp.eq.s32.totalorder %s23, 1
      %p194 = por %p192, %p193
      %p196 = scmp.ne.s32.totalorder %s181, %s195
      %p197 = scmp.eq.s32.totalorder %s23, 0
      %p198 = por %p196, %p197
      %s200 = sadd.s32 %s199, 1
      %p203 = scmp.eq.s32.totalorder %s17, 1
      %p204 = scmp.ne.s32.totalorder %s199, %s201
      %p205 = scmp.eq.s32.totalorder %s17, 0
      %p206 = por %p204, %p205
      %p207 = scmp.ne.s32.totalorder %s199, %s201
      %p208 = scmp.eq.s32.totalorder %s22, 1
      %p209 = por %p207, %p208
      %p210 = scmp.ne.s32.totalorder %s201, %s202
      %p211 = scmp.eq.s32.totalorder %s22, 0
      %p212 = por %p210, %p211
      %p213 = scmp.ne.s32.totalorder %s201, %s202
      %p214 = scmp.eq.s32.totalorder %s23, 1
      %p215 = por %p213, %p214
      %p217 = scmp.ne.s32.totalorder %s202, %s216
      %p218 = scmp.eq.s32.totalorder %s23, 0
      %p219 = por %p217, %p218
      %s221 = sadd.s32 %s220, 1
      %p224 = scmp.eq.s32.totalorder %s17, 1
      %p225 = scmp.ne.s32.totalorder %s220, %s222
      %p226 = scmp.eq.s32.totalorder %s17, 0
      %p227 = por %p225, %p226
      %p228 = scmp.ne.s32.totalorder %s220, %s222
      %p229 = scmp.eq.s32.totalorder %s22, 1
      %p230 = por %p228, %p229
      %p231 = scmp.ne.s32.totalorder %s222, %s223
      %p232 = scmp.eq.s32.totalorder %s22, 0
      %p233 = por %p231, %p232
      %p234 = scmp.ne.s32.totalorder %s222, %s223
      %p235 = scmp.eq.s32.totalorder %s23, 1
      %p236 = por %p234, %p235
      %p238 = scmp.ne.s32.totalorder %s223, %s237
      %p239 = scmp.eq.s32.totalorder %s23, 0
      %p240 = por %p238, %p239
      %s242 = sadd.s32 %s241, 1
      %p245 = scmp.eq.s32.totalorder %s17, 1
      %p246 = scmp.ne.s32.totalorder %s241, %s243
      %p247 = scmp.eq.s32.totalorder %s17, 0
      %p248 = por %p246, %p247
      %p249 = scmp.ne.s32.totalorder %s241, %s243
      %p250 = scmp.eq.s32.totalorder %s22, 1
      %p251 = por %p249, %p250
      %p252 = scmp.ne.s32.totalorder %s243, %s244
      %p253 = scmp.eq.s32.totalorder %s22, 0
      %p254 = por %p252, %p253
      %p255 = scmp.ne.s32.totalorder %s243, %s244
      %p256 = scmp.eq.s32.totalorder %s23, 1
      %p257 = por %p255, %p256
      %p259 = scmp.ne.s32.totalorder %s244, %s258
      %p260 = scmp.eq.s32.totalorder %s23, 0
      %p261 = por %p259, %p260
      %p262 = scmp.le.s32.totalorder 1, %s17
      %p263 = scmp.lt.s32.totalorder %s17, 3
      %p264 = pnand %p262, %p263
      %p265 = pneg %p264
      // Predicated region
      $region9: #{sage_forward.1} parent=5 // pred_check
        _
      $region10: #{sage_forward.1} parent=5 // pred_check_branch
        %267 = sbr.rel (%p264) target = $region12
      $region11: #{sage_forward.1} parent=5 // pred_region
        %s268 = ssub.s32 %s17, 1
        // Predicated region
        $region13: #{sage_forward.1} parent=11 // pred_check
          %p269 = pneg %p50
        $region14: #{sage_forward.1} parent=11 // pred_check_branch
          %271 = sbr.rel (%p269) target = $region16
        $region15: #{sage_forward.1} parent=11 // pred_region
          _
        $region16: #{sage_forward.1} parent=11 // pred_fallthru
          _
        // Predicated region
        $region17: #{sage_forward.1} parent=11 // pred_check
          %p272 = pneg %p71
        $region18: #{sage_forward.1} parent=11 // pred_check_branch
          %274 = sbr.rel (%p272) target = $region20
        $region19: #{sage_forward.1} parent=11 // pred_region
          _
        $region20: #{sage_forward.1} parent=11 // pred_fallthru
          _
        // Predicated region
        $region21: #{sage_forward.1} parent=11 // pred_check
          %p275 = pneg %p170
        $region22: #{sage_forward.1} parent=11 // pred_check_branch
          %277 = sbr.rel (%p275) target = $region24
        $region23: #{sage_forward.1} parent=11 // pred_region
          _
        $region24: #{sage_forward.1} parent=11 // pred_fallthru
          _
        // Predicated region
        $region25: #{sage_forward.1} parent=11 // pred_check
          %p278 = pneg %p191
        $region26: #{sage_forward.1} parent=11 // pred_check_branch
          %280 = sbr.rel (%p278) target = $region28
        $region27: #{sage_forward.1} parent=11 // pred_region
          _
        $region28: #{sage_forward.1} parent=11 // pred_fallthru
          _
        // Predicated region
        $region29: #{sage_forward.1} parent=11 // pred_check
          %p281 = pneg %p212
        $region30: #{sage_forward.1} parent=11 // pred_check_branch
          %283 = sbr.rel (%p281) target = $region32
        $region31: #{sage_forward.1} parent=11 // pred_region
          _
        $region32: #{sage_forward.1} parent=11 // pred_fallthru
          _
        // Predicated region
        $region33: #{sage_forward.1} parent=11 // pred_check
          %p284 = pneg %p233
        $region34: #{sage_forward.1} parent=11 // pred_check_branch
          %286 = sbr.rel (%p284) target = $region36
        $region35: #{sage_forward.1} parent=11 // pred_region
          _
        $region36: #{sage_forward.1} parent=11 // pred_fallthru
          _
      $region12: #{sage_forward.1} parent=5 // pred_fallthru
        _
      %p287 = scmp.lt.s32.totalorder %s17, 2
      // Predicated region
      $region37: #{sage_forward.1} parent=5 // pred_check
        %p288 = pneg %p287
      $region38: #{sage_forward.1} parent=5 // pred_check_branch
        %290 = sbr.rel (%p288) target = $region40
      $region39: #{sage_forward.1} parent=5 // pred_region
        // Predicated region
        $region41: #{sage_forward.1} parent=39 // pred_check
          %p291 = pneg %p91
        $region42: #{sage_forward.1} parent=39 // pred_check_branch
          %293 = sbr.rel (%p291) target = $region44
        $region43: #{sage_forward.1} parent=39 // pred_region
          %p294 = scmp.lt.s32.totalorder %s24, 1
          %s295 = scalar_select %p294, %s24, 1
          %s296 = smul.addr %s295, 16
          %s297 = smul.addr %s296, 8
          %s298 = scalar_lea.vmem %s3, %s297
        $region44: #{sage_forward.1} parent=39 // pred_fallthru
          _
        // Predicated region
        $region45: #{sage_forward.1} parent=39 // pred_check
          %p299 = pneg %p117
        $region46: #{sage_forward.1} parent=39 // pred_check_branch
          %301 = sbr.rel (%p299) target = $region48
        $region47: #{sage_forward.1} parent=39 // pred_region
          %p302 = scmp.lt.s32.totalorder %s24, 1
          %s303 = scalar_select %p302, %s24, 1
          %s304 = smul.addr %s303, 16
          %s305 = smul.addr %s304, 8
          %s306 = scalar_lea.vmem %s4, %s305
        $region48: #{sage_forward.1} parent=39 // pred_fallthru
          _
        // Predicated region
        $region49: #{sage_forward.1} parent=39 // pred_check
          %p307 = pneg %p143
        $region50: #{sage_forward.1} parent=39 // pred_check_branch
          %309 = sbr.rel (%p307) target = $region52
        $region51: #{sage_forward.1} parent=39 // pred_region
          %p310 = scmp.lt.s32.totalorder %s24, 1
          %s311 = scalar_select %p310, %s24, 1
          %s312 = scalar_lea.vmem %s5, %s311
        $region52: #{sage_forward.1} parent=39 // pred_fallthru
          _
      $region40: #{sage_forward.1} parent=5 // pred_fallthru
        _
      %p313 = scmp.le.s32.totalorder 1, %s17
      %p314 = scmp.lt.s32.totalorder %s17, 3
      %p315 = pnand %p313, %p314
      %p316 = pneg %p315
      // Predicated region
      $region53: #{sage_forward.1} parent=5 // pred_check
        _
      $region54: #{sage_forward.1} parent=5 // pred_check_branch
        %318 = sbr.rel (%p315) target = $region56
      $region55: #{sage_forward.1} parent=5 // pred_region
        %s319 = ssub.s32 %s17, 1
        %p320 = pneg %p50
        %p321 = pneg %p47
        %p322 = pneg %p71
        %p323 = pneg %p68
        %p324 = scmp.lt.s32.totalorder %s26, 1
        %s325 = scalar_select %p324, %s26, 1
        %s326 = smul.addr %s325, 16
        %s327 = smul.addr %s326, 8
        %s328 = scalar_lea.vmem %s3, %s327
        %p329 = pneg %p97
        %p330 = pneg %p94
        %p331 = scmp.lt.s32.totalorder %s26, 1
        %s332 = scalar_select %p331, %s26, 1
        %s333 = smul.addr %s332, 16
        %s334 = smul.addr %s333, 8
        %s335 = scalar_lea.vmem %s4, %s334
        %p336 = pneg %p123
        %p337 = pneg %p120
        %p338 = scmp.lt.s32.totalorder %s26, 1
        %s339 = scalar_select %p338, %s26, 1
        %s340 = scalar_lea.vmem %s5, %s339
        %p341 = pneg %p149
        %p342 = pneg %p146
        %p343 = pneg %p170
        %p344 = pneg %p167
        %p345 = pneg %p191
        %p346 = pneg %p188
        %p347 = pneg %p212
        %p348 = pneg %p209
        %p349 = pneg %p233
        %p350 = pneg %p230
        %p351 = pneg %p254
        %p352 = pneg %p251
        %p353 = scmp.lt.s32.totalorder %s26, 1
        %s354 = scalar_select %p353, %s26, 1
        %s355 = smul.addr %s354, 16
        %s356 = smul.addr %s355, 8
        %s357 = scalar_lea.vmem %s3, %s356
        %p358 = scmp.lt.s32.totalorder %s26, 1
        %s359 = scalar_select %p358, %s26, 1
        %s360 = smul.addr %s359, 16
        %s361 = smul.addr %s360, 8
        %s362 = scalar_lea.vmem %s4, %s361
        %p363 = scmp.lt.s32.totalorder %s26, 1
        %s364 = scalar_select %p363, %s26, 1
        %s365 = scalar_lea.vmem %s5, %s364
        %p367 = scmp.eq.s32.totalorder %s26, 0
        %p368 = scmp.eq.s32.totalorder %s27, 0
        %p369 = pnand %p367, %p368
        %p370 = pneg %p369
        // Predicated region
        $region57: #{sage_forward.1} parent=55 // pred_check
          _
        $region58: #{sage_forward.1} parent=55 // pred_check_branch
          %372 = sbr.rel (%p369) target = $region60
        $region59: #{sage_forward.1} parent=55 // pred_region
          %p374 = scmp.lt.u32.totalorder 64, 8
          %p375 = pneg %p374
          // Predicated region
          $region61: #{sage_forward.1} parent=59 // pred_check
            _
          $region62: #{sage_forward.1} parent=59 // pred_check_branch
            %377 = sbr.rel (%p374) target = $region64
          $region63: #{sage_forward.1} parent=59 // pred_region
            %s393 = sand.u32 64, 7
            %p394 = scmp.eq.s32.totalorder %s393, 0
            // Predicated region
            $region76: #{sage_forward.1} parent=63 // pred_check
              %p395 = pneg %p394
            $region77: #{sage_forward.1} parent=63 // pred_check_branch
              %397 = sbr.rel (%p395) target = $region79
            $region78: #{sage_forward.1} parent=63 // pred_region
              loop: start=0, step=1, limit=1
              $region80: #{sage_forward.1} parent=78 // loop_pre_header
                _
              $region81: #{sage_forward.1} parent=78 // loop_header
                %s399 = sphi 0, %s403
                %p400 = scmp.ge.s32.totalorder %s399, 1
                %s404 = sphi %s2, %s2
                %s405 = sphi [#allocation2], [#allocation2]
              $region82: #{sage_forward.1} parent=78 // loop_header_branch
                %402 = sbr.rel (%p400) target = $region86
              $region83: #{sage_forward.1} parent=78 // loop_body
                %v406 = vld [vmem:[%s404] sm:$0xff]
                %407 = vst [vmem:[%s405] sm:$0xff] %v406
                %v408 = vld [vmem:[%s404 + $0x8] sm:$0xff]
                %409 = vst [vmem:[%s405 + $0x8] sm:$0xff] %v408
                %v410 = vld [vmem:[%s404 + $0x10] sm:$0xff]
                %411 = vst [vmem:[%s405 + $0x10] sm:$0xff] %v410
                %v412 = vld [vmem:[%s404 + $0x18] sm:$0xff]
                %413 = vst [vmem:[%s405 + $0x18] sm:$0xff] %v412
                %v414 = vld [vmem:[%s404 + $0x20] sm:$0xff]
                %415 = vst [vmem:[%s405 + $0x20] sm:$0xff] %v414
                %v416 = vld [vmem:[%s404 + $0x28] sm:$0xff]
                %417 = vst [vmem:[%s405 + $0x28] sm:$0xff] %v416
                %v418 = vld [vmem:[%s404 + $0x30] sm:$0xff]
                %419 = vst [vmem:[%s405 + $0x30] sm:$0xff] %v418
                %v420 = vld [vmem:[%s404 + $0x38] sm:$0xff]
                %421 = vst [vmem:[%s405 + $0x38] sm:$0xff] %v420
              $region84: #{sage_forward.1} parent=78 // loop_footer
                %s403 = sadd.s32 1, %s399
              $region85: #{sage_forward.1} parent=78 // loop_footer_branch
                %398 = sbr.rel target = $region81
              $region86: #{sage_forward.1} parent=78 // loop_exit
                _
            $region79: #{sage_forward.1} parent=63 // pred_fallthru
              _
            %p422 = pneg %p394
            // Predicated region
            $region87: #{sage_forward.1} parent=63 // pred_check
              _
            $region88: #{sage_forward.1} parent=63 // pred_check_branch
              %424 = sbr.rel (%p394) target = $region90
            $region89: #{sage_forward.1} parent=63 // pred_region
              %s425 = sand.u32 64, 7
            $region90: #{sage_forward.1} parent=63 // pred_fallthru
              _
          $region64: #{sage_forward.1} parent=59 // pred_fallthru
            _
          // Predicated region
          $region65: #{sage_forward.1} parent=59 // pred_check
            %p378 = pneg %p374
          $region66: #{sage_forward.1} parent=59 // pred_check_branch
            %380 = sbr.rel (%p378) target = $region68
          $region67: #{sage_forward.1} parent=59 // pred_region
            %s381 = sshll.u32 1, 64
            %s382 = ssub.s32 %s381, 1
            loop: start=0, step=1, limit=1
            $region69: #{sage_forward.1} parent=67 // loop_pre_header
              _
            $region70: #{sage_forward.1} parent=67 // loop_header
              %s384 = sphi 0, %s388
              %p385 = scmp.ge.s32.totalorder %s384, 1
              %s389 = sphi %s2, %s2
              %s390 = sphi [#allocation2], [#allocation2]
            $region71: #{sage_forward.1} parent=67 // loop_header_branch
              %387 = sbr.rel (%p385) target = $region75
            $region72: #{sage_forward.1} parent=67 // loop_body
              %v391 = vld [vmem:[%s389] sm:%s382]
              %392 = vst [vmem:[%s390] sm:%s382] %v391
            $region73: #{sage_forward.1} parent=67 // loop_footer
              %s388 = sadd.s32 1, %s384
            $region74: #{sage_forward.1} parent=67 // loop_footer_branch
              %383 = sbr.rel target = $region70
            $region75: #{sage_forward.1} parent=67 // loop_exit
              _
          $region68: #{sage_forward.1} parent=59 // pred_fallthru
            _
          // Predicated region
          $region91: #{sage_forward.1} parent=59 // pred_check
            _
          $region92: #{sage_forward.1} parent=59 // pred_check_branch
            %428 = sbr.rel (0) target = $region94
          $region93: #{sage_forward.1} parent=59 // pred_region
            %429 = vsyncadd [#allocation3], 1024
          $region94: #{sage_forward.1} parent=59 // pred_fallthru
            _
          %s430 = smul.u32 4, 16
          %s431 = smul.u32 %s430, 1
          %s432 = sshll.u32 %s431, 4
          %433 = dma.done [#allocation3], %s432
        $region60: #{sage_forward.1} parent=55 // pred_fallthru
          _
        %p434 = scmp.lt.s32.totalorder %s26, 0
        %s435 = ssub.s32 0, %s26
        %s436 = scalar_select %p434, %s435, %s26
        %s437 = sand.u32 %s436, 1
        %s438 = ssub.s32 0, %s437
        %s439 = scalar_select %p434, %s438, %s437
        %p440 = scmp.ne.s32.totalorder %s439, 0
        %p441 = scmp.lt.s32.totalorder %s439, 0
        %p442 = pnand %p441, %p440
        %p443 = pneg %p442
        %s444 = sadd.s32 %s439, 2
        %s445 = scalar_select %p443, %s444, %s439
        %s446 = ssub.s32 1, %s445
        %s447 = smul.u32 %s27, 128
        %s448 = smul.u32 %s445, 16
        %s449 = smul.addr %s448, 4
        %s450 = scalar_lea.vmem [#allocation2], %s449
        %v451 = vld [vmem:[%s450] sm:$0xf]
        %v452 = vld [vmem:[%s450 + $0x4] sm:$0xf]
        %v453 = vld [vmem:[%s450 + $0x8] sm:$0xf]
        %v454 = vld [vmem:[%s450 + $0xc] sm:$0xf]
        %v455 = vld [vmem:[%s450 + $0x10] sm:$0xf]
        %v456 = vld [vmem:[%s450 + $0x14] sm:$0xf]
        %v457 = vld [vmem:[%s450 + $0x18] sm:$0xf]
        %v458 = vld [vmem:[%s450 + $0x1c] sm:$0xf]
        %v459 = vld [vmem:[%s450 + $0x20] sm:$0xf]
        %v460 = vld [vmem:[%s450 + $0x24] sm:$0xf]
        %v461 = vld [vmem:[%s450 + $0x28] sm:$0xf]
        %v462 = vld [vmem:[%s450 + $0x2c] sm:$0xf]
        %v463 = vld [vmem:[%s450 + $0x30] sm:$0xf]
        %v464 = vld [vmem:[%s450 + $0x34] sm:$0xf]
        %v465 = vld [vmem:[%s450 + $0x38] sm:$0xf]
        %v466 = vld [vmem:[%s450 + $0x3c] sm:$0xf]
        %s467 = sshra.s32 %s447, 3
        %s468 = sand.u32 %s447, 7
        %s469 = smul.addr %s467, 4
        %s470 = scalar_lea.vmem %s0, %s469
        %v471 = vld [vmem:[%s470] sm:$0xf]
        %v472 = vld [vmem:[%s470 + $0x4] sm:$0xf]
        %v473 = vld [vmem:[%s470 + $0x8] sm:$0xf]
        %v474 = vld [vmem:[%s470 + $0xc] sm:$0xf]
        %v475 = vld [vmem:[%s470 + $0x10] sm:$0xf]
        %v476 = vld [vmem:[%s470 + $0x14] sm:$0xf]
        %v477 = vld [vmem:[%s470 + $0x18] sm:$0xf]
        %v478 = vld [vmem:[%s470 + $0x1c] sm:$0xf]
        %v479 = vld [vmem:[%s470 + $0x20] sm:$0xf]
        %v480 = vld [vmem:[%s470 + $0x24] sm:$0xf]
        %v481 = vld [vmem:[%s470 + $0x28] sm:$0xf]
        %v482 = vld [vmem:[%s470 + $0x2c] sm:$0xf]
        %v483 = vld [vmem:[%s470 + $0x30] sm:$0xf]
        %v484 = vld [vmem:[%s470 + $0x34] sm:$0xf]
        %v485 = vld [vmem:[%s470 + $0x38] sm:$0xf]
        %v486 = vld [vmem:[%s470 + $0x3c] sm:$0xf]
        %v503 = vunpack.c.l.b16 %v471
        %v504 = vunpack.c.l.b16 %v472
        %v505 = vunpack.c.l.b16 %v473
        %v506 = vunpack.c.l.b16 %v474
        %v507 = vunpack.c.l.b16 %v475
        %v508 = vunpack.c.l.b16 %v476
        %v509 = vunpack.c.l.b16 %v477
        %v510 = vunpack.c.l.b16 %v478
        %v511 = vunpack.c.l.b16 %v479
        %v512 = vunpack.c.l.b16 %v480
        %v513 = vunpack.c.l.b16 %v481
        %v514 = vunpack.c.l.b16 %v482
        %v515 = vunpack.c.l.b16 %v483
        %v516 = vunpack.c.l.b16 %v484
        %v517 = vunpack.c.l.b16 %v485
        %v518 = vunpack.c.l.b16 %v486
        %v519 = vpack.c.b16 %v504, %v503
        %v520 = vpack.c.b16 %v506, %v505
        %v521 = vpack.c.b16 %v508, %v507
        %v522 = vpack.c.b16 %v510, %v509
        %v523 = vpack.c.b16 %v512, %v511
        %v524 = vpack.c.b16 %v514, %v513
        %v525 = vpack.c.b16 %v516, %v515
        %v526 = vpack.c.b16 %v518, %v517
        %v551 = vunpack.c.l.b16 %v451
        %v552 = vunpack.c.l.b16 %v452
        %v553 = vunpack.c.l.b16 %v453
        %v554 = vunpack.c.l.b16 %v454
        %v555 = vunpack.c.l.b16 %v455
        %v556 = vunpack.c.l.b16 %v456
        %v557 = vunpack.c.l.b16 %v457
        %v558 = vunpack.c.l.b16 %v458
        %v559 = vunpack.c.l.b16 %v459
        %v560 = vunpack.c.l.b16 %v460
        %v561 = vunpack.c.l.b16 %v461
        %v562 = vunpack.c.l.b16 %v462
        %v563 = vunpack.c.l.b16 %v463
        %v564 = vunpack.c.l.b16 %v464
        %v565 = vunpack.c.l.b16 %v465
        %v566 = vunpack.c.l.b16 %v466
        %v567 = vpack.c.b16 %v552, %v551
        %v568 = vpack.c.b16 %v554, %v553
        %v569 = vpack.c.b16 %v556, %v555
        %v570 = vpack.c.b16 %v558, %v557
        %v571 = vpack.c.b16 %v560, %v559
        %v572 = vpack.c.b16 %v562, %v561
        %v573 = vpack.c.b16 %v564, %v563
        %v574 = vpack.c.b16 %v566, %v565
        %583 = vmatprep.subr.bf16.mxu0 0
        %584 = vmatpush1.bf16.msra.mxu0 %v574
        %585 = vmatprep.subr.bf16.mxu0 0
        %586 = vmatpush1.bf16.msra.mxu0 %v573
        %587 = vmatprep.subr.bf16.mxu0 0
        %588 = vmatpush1.bf16.msra.mxu0 %v572
        %589 = vmatprep.subr.bf16.mxu0 0
        %590 = vmatpush1.bf16.msra.mxu0 %v571
        %591 = vmatprep.subr.bf16.mxu0 0
        %592 = vmatpush1.bf16.msra.mxu0 %v570
        %593 = vmatprep.subr.bf16.mxu0 0
        %594 = vmatpush1.bf16.msra.mxu0 %v569
        %595 = vmatprep.subr.bf16.mxu0 0
        %596 = vmatpush1.bf16.msra.mxu0 %v568
        %597 = vmatprep.subr.bf16.mxu0 0
        %598 = vmatpush1.bf16.msra.mxu0 %v567
        %599 = vmatprep.subr.bf16.mxu0 0
        %600 = vmatpush2.bf16.msra.mxu0 0
        %601 = vmatprep.subr.bf16.mxu0 0
        %602 = vmatpush2.bf16.msra.mxu0 0
        %603 = vmatprep.subr.bf16.mxu0 0
        %604 = vmatpush2.bf16.msra.mxu0 0
        %605 = vmatprep.subr.bf16.mxu0 0
        %606 = vmatpush2.bf16.msra.mxu0 0
        %607 = vmatprep.subr.bf16.mxu0 0
        %608 = vmatpush2.bf16.msra.mxu0 0
        %609 = vmatprep.subr.bf16.mxu0 0
        %610 = vmatpush2.bf16.msra.mxu0 0
        %611 = vmatprep.subr.bf16.mxu0 0
        %612 = vmatpush2.bf16.msra.mxu0 0
        %613 = vmatprep.subr.bf16.mxu0 0
        %614 = vmatpush2.bf16.msra.mxu0 0
        %615 = vmatprep.mubr.bf16.mxu0 0
        %616 = vmatmul.mubr.bf16.gmra.mxu0 %v519
        %v617 = vpop.f32.mrf.mxu0
        %v618 = vadd.f32 0.0, %v617
        %v619 = vpop.f32.mrf.mxu0
        %v620 = vpop.f32.mrf.mxu0
        %v621 = vadd.f32 0.0, %v620
        %v622 = vpop.f32.mrf.mxu0
        %623 = vmatprep.mubr.bf16.mxu0 0
        %624 = vmatmul.mubr.bf16.gmra.mxu0 %v520
        %v625 = vpop.f32.mrf.mxu0
        %v626 = vadd.f32 0.0, %v625
        %v627 = vpop.f32.mrf.mxu0
        %v628 = vpop.f32.mrf.mxu0
        %v629 = vadd.f32 0.0, %v628
        %v630 = vpop.f32.mrf.mxu0
        %631 = vmatprep.mubr.bf16.mxu0 0
        %632 = vmatmul.mubr.bf16.gmra.mxu0 %v521
        %v633 = vpop.f32.mrf.mxu0
        %v634 = vadd.f32 0.0, %v633
        %v635 = vpop.f32.mrf.mxu0
        %v636 = vpop.f32.mrf.mxu0
        %v637 = vadd.f32 0.0, %v636
        %v638 = vpop.f32.mrf.mxu0
        %639 = vmatprep.mubr.bf16.mxu0 0
        %640 = vmatmul.mubr.bf16.gmra.mxu0 %v522
        %v641 = vpop.f32.mrf.mxu0
        %v642 = vadd.f32 0.0, %v641
        %v643 = vpop.f32.mrf.mxu0
        %v644 = vpop.f32.mrf.mxu0
        %v645 = vadd.f32 0.0, %v644
        %v646 = vpop.f32.mrf.mxu0
        %647 = vmatprep.mubr.bf16.mxu0 0
        %648 = vmatmul.mubr.bf16.gmra.mxu0 %v523
        %v649 = vpop.f32.mrf.mxu0
        %v650 = vadd.f32 0.0, %v649
        %v651 = vpop.f32.mrf.mxu0
        %v652 = vpop.f32.mrf.mxu0
        %v653 = vadd.f32 0.0, %v652
        %v654 = vpop.f32.mrf.mxu0
        %655 = vmatprep.mubr.bf16.mxu0 0
        %656 = vmatmul.mubr.bf16.gmra.mxu0 %v524
        %v657 = vpop.f32.mrf.mxu0
        %v658 = vadd.f32 0.0, %v657
        %v659 = vpop.f32.mrf.mxu0
        %v660 = vpop.f32.mrf.mxu0
        %v661 = vadd.f32 0.0, %v660
        %v662 = vpop.f32.mrf.mxu0
        %663 = vmatprep.mubr.bf16.mxu0 0
        %664 = vmatmul.mubr.bf16.gmra.mxu0 %v525
        %v665 = vpop.f32.mrf.mxu0
        %v666 = vadd.f32 0.0, %v665
        %v667 = vpop.f32.mrf.mxu0
        %v668 = vpop.f32.mrf.mxu0
        %v669 = vadd.f32 0.0, %v668
        %v670 = vpop.f32.mrf.mxu0
        %671 = vmatprep.mubr.bf16.mxu0 0
        %672 = vmatmul.mubr.bf16.gmra.mxu0 %v526
        %v673 = vpop.f32.mrf.mxu0
        %v674 = vadd.f32 0.0, %v673
        %v675 = vpop.f32.mrf.mxu0
        %v676 = vpop.f32.mrf.mxu0
        %v677 = vadd.f32 0.0, %v676
        %v678 = vpop.f32.mrf.mxu0
        %679 = vdwg.mxu0
        %s680 = scalar_lea.vmem %s1, %s447
        %v681 = vld [vmem:[%s680] sm:$0xff]
        %v682 = vld [vmem:[%s680 + $0x8] sm:$0xff]
        %v683 = vld [vmem:[%s680 + $0x10] sm:$0xff]
        %v684 = vld [vmem:[%s680 + $0x18] sm:$0xff]
        %v685 = vld [vmem:[%s680 + $0x20] sm:$0xff]
        %v686 = vld [vmem:[%s680 + $0x28] sm:$0xff]
        %v687 = vld [vmem:[%s680 + $0x30] sm:$0xff]
        %v688 = vld [vmem:[%s680 + $0x38] sm:$0xff]
        %v689 = vld [vmem:[%s680 + $0x40] sm:$0xff]
        %v690 = vld [vmem:[%s680 + $0x48] sm:$0xff]
        %v691 = vld [vmem:[%s680 + $0x50] sm:$0xff]
        %v692 = vld [vmem:[%s680 + $0x58] sm:$0xff]
        %v693 = vld [vmem:[%s680 + $0x60] sm:$0xff]
        %v694 = vld [vmem:[%s680 + $0x68] sm:$0xff]
        %v695 = vld [vmem:[%s680 + $0x70] sm:$0xff]
        %v696 = vld [vmem:[%s680 + $0x78] sm:$0xff]
        %698 = vset.pattern.permute.xlu0 0
        %699 = vperm.xlu0 %698, %v681
        %v700 = vpop.permute.xlu0 %699
        %703 = vset.pattern.permute.xlu0 0
        %704 = vperm.xlu0 %703, %v682
        %v705 = vpop.permute.xlu0 %704
        %708 = vset.pattern.permute.xlu0 0
        %709 = vperm.xlu0 %708, %v683
        %v710 = vpop.permute.xlu0 %709
        %713 = vset.pattern.permute.xlu0 0
        %714 = vperm.xlu0 %713, %v684
        %v715 = vpop.permute.xlu0 %714
        %718 = vset.pattern.permute.xlu0 0
        %719 = vperm.xlu0 %718, %v685
        %v720 = vpop.permute.xlu0 %719
        %723 = vset.pattern.permute.xlu0 0
        %724 = vperm.xlu0 %723, %v686
        %v725 = vpop.permute.xlu0 %724
        %728 = vset.pattern.permute.xlu0 0
        %729 = vperm.xlu0 %728, %v687
        %v730 = vpop.permute.xlu0 %729
        %733 = vset.pattern.permute.xlu0 0
        %734 = vperm.xlu0 %733, %v688
        %v735 = vpop.permute.xlu0 %734
        %738 = vset.pattern.permute.xlu0 0
        %739 = vperm.xlu0 %738, %v689
        %v740 = vpop.permute.xlu0 %739
        %743 = vset.pattern.permute.xlu0 0
        %744 = vperm.xlu0 %743, %v690
        %v745 = vpop.permute.xlu0 %744
        %748 = vset.pattern.permute.xlu0 0
        %749 = vperm.xlu0 %748, %v691
        %v750 = vpop.permute.xlu0 %749
        %753 = vset.pattern.permute.xlu0 0
        %754 = vperm.xlu0 %753, %v692
        %v755 = vpop.permute.xlu0 %754
        %758 = vset.pattern.permute.xlu0 0
        %759 = vperm.xlu0 %758, %v693
        %v760 = vpop.permute.xlu0 %759
        %763 = vset.pattern.permute.xlu0 0
        %764 = vperm.xlu0 %763, %v694
        %v765 = vpop.permute.xlu0 %764
        %768 = vset.pattern.permute.xlu0 0
        %769 = vperm.xlu0 %768, %v695
        %v770 = vpop.permute.xlu0 %769
        %773 = vset.pattern.permute.xlu0 0
        %774 = vperm.xlu0 %773, %v696
        %v775 = vpop.permute.xlu0 %774
        %v777 = vmul.f32 %v618, %v700
        %v778 = vmul.f32 %v621, %v705
        %v779 = vmul.f32 %v626, %v710
        %v780 = vmul.f32 %v629, %v715
        %v781 = vmul.f32 %v634, %v720
        %v782 = vmul.f32 %v637, %v725
        %v783 = vmul.f32 %v642, %v730
        %v784 = vmul.f32 %v645, %v735
        %v785 = vmul.f32 %v650, %v740
        %v786 = vmul.f32 %v653, %v745
        %v787 = vmul.f32 %v658, %v750
        %v788 = vmul.f32 %v661, %v755
        %v789 = vmul.f32 %v666, %v760
        %v790 = vmul.f32 %v669, %v765
        %v791 = vmul.f32 %v674, %v770
        %v792 = vmul.f32 %v677, %v775
        %s793 = sadd.s32 %s467, %s448
        %s794 = smul.addr %s793, 4
        %s795 = scalar_lea.vmem [#allocation2], %s794
        %v796 = vld [vmem:[%s795] sm:$0xf]
        %v797 = vld [vmem:[%s795 + $0x4] sm:$0xf]
        %v798 = vld [vmem:[%s795 + $0x8] sm:$0xf]
        %v799 = vld [vmem:[%s795 + $0xc] sm:$0xf]
        %v800 = vld [vmem:[%s795 + $0x10] sm:$0xf]
        %v801 = vld [vmem:[%s795 + $0x14] sm:$0xf]
        %v802 = vld [vmem:[%s795 + $0x18] sm:$0xf]
        %v803 = vld [vmem:[%s795 + $0x1c] sm:$0xf]
        %v804 = vld [vmem:[%s795 + $0x20] sm:$0xf]
        %v805 = vld [vmem:[%s795 + $0x24] sm:$0xf]
        %v806 = vld [vmem:[%s795 + $0x28] sm:$0xf]
        %v807 = vld [vmem:[%s795 + $0x2c] sm:$0xf]
        %v808 = vld [vmem:[%s795 + $0x30] sm:$0xf]
        %v809 = vld [vmem:[%s795 + $0x34] sm:$0xf]
        %v810 = vld [vmem:[%s795 + $0x38] sm:$0xf]
        %v811 = vld [vmem:[%s795 + $0x3c] sm:$0xf]
        %v812 = vunpack.c.l.bf16 %v796
        %v813 = vunpack.c.l.bf16 %v797
        %v814 = vunpack.c.l.bf16 %v798
        %v815 = vunpack.c.l.bf16 %v799
        %v816 = vunpack.c.l.bf16 %v800
        %v817 = vunpack.c.l.bf16 %v801
        %v818 = vunpack.c.l.bf16 %v802
        %v819 = vunpack.c.l.bf16 %v803
        %v820 = vunpack.c.l.bf16 %v804
        %v821 = vunpack.c.l.bf16 %v805
        %v822 = vunpack.c.l.bf16 %v806
        %v823 = vunpack.c.l.bf16 %v807
        %v824 = vunpack.c.l.bf16 %v808
        %v825 = vunpack.c.l.bf16 %v809
        %v826 = vunpack.c.l.bf16 %v810
        %v827 = vunpack.c.l.bf16 %v811
        %v828 = vld [vmem:[%s357] sm:$0xff]
        %v829 = vld [vmem:[%s357 + $0x8] sm:$0xff]
        %v830 = vld [vmem:[%s357 + $0x10] sm:$0xff]
        %v831 = vld [vmem:[%s357 + $0x18] sm:$0xff]
        %v832 = vld [vmem:[%s357 + $0x20] sm:$0xff]
        %v833 = vld [vmem:[%s357 + $0x28] sm:$0xff]
        %v834 = vld [vmem:[%s357 + $0x30] sm:$0xff]
        %v835 = vld [vmem:[%s357 + $0x38] sm:$0xff]
        %v836 = vld [vmem:[%s357 + $0x40] sm:$0xff]
        %v837 = vld [vmem:[%s357 + $0x48] sm:$0xff]
        %v838 = vld [vmem:[%s357 + $0x50] sm:$0xff]
        %v839 = vld [vmem:[%s357 + $0x58] sm:$0xff]
        %v840 = vld [vmem:[%s357 + $0x60] sm:$0xff]
        %v841 = vld [vmem:[%s357 + $0x68] sm:$0xff]
        %v842 = vld [vmem:[%s357 + $0x70] sm:$0xff]
        %v843 = vld [vmem:[%s357 + $0x78] sm:$0xff]
        %v844 = vld [vmem:[%s362] sm:$0xff]
        %v845 = vld [vmem:[%s362 + $0x8] sm:$0xff]
        %v846 = vld [vmem:[%s362 + $0x10] sm:$0xff]
        %v847 = vld [vmem:[%s362 + $0x18] sm:$0xff]
        %v848 = vld [vmem:[%s362 + $0x20] sm:$0xff]
        %v849 = vld [vmem:[%s362 + $0x28] sm:$0xff]
        %v850 = vld [vmem:[%s362 + $0x30] sm:$0xff]
        %v851 = vld [vmem:[%s362 + $0x38] sm:$0xff]
        %v852 = vld [vmem:[%s362 + $0x40] sm:$0xff]
        %v853 = vld [vmem:[%s362 + $0x48] sm:$0xff]
        %v854 = vld [vmem:[%s362 + $0x50] sm:$0xff]
        %v855 = vld [vmem:[%s362 + $0x58] sm:$0xff]
        %v856 = vld [vmem:[%s362 + $0x60] sm:$0xff]
        %v857 = vld [vmem:[%s362 + $0x68] sm:$0xff]
        %v858 = vld [vmem:[%s362 + $0x70] sm:$0xff]
        %v859 = vld [vmem:[%s362 + $0x78] sm:$0xff]
        %860 = vmatprep.subr.mxu0 0.0
        %861 = vmatpush1.msra.mxu0 %v859
        %862 = vmatprep.subr.mxu0 0.0
        %863 = vmatpush1.msra.mxu0 %v858
        %864 = vmatprep.subr.mxu0 0.0
        %865 = vmatpush1.msra.mxu0 %v857
        %866 = vmatprep.subr.mxu0 0.0
        %867 = vmatpush1.msra.mxu0 %v856
        %868 = vmatprep.subr.mxu0 0.0
        %869 = vmatpush1.msra.mxu0 %v855
        %870 = vmatprep.subr.mxu0 0.0
        %871 = vmatpush1.msra.mxu0 %v854
        %872 = vmatprep.subr.mxu0 0.0
        %873 = vmatpush1.msra.mxu0 %v853
        %874 = vmatprep.subr.mxu0 0.0
        %875 = vmatpush1.msra.mxu0 %v852
        %876 = vmatprep.subr.mxu0 0.0
        %877 = vmatpush1.msra.mxu0 %v851
        %878 = vmatprep.subr.mxu0 0.0
        %879 = vmatpush1.msra.mxu0 %v850
        %880 = vmatprep.subr.mxu0 0.0
        %881 = vmatpush1.msra.mxu0 %v849
        %882 = vmatprep.subr.mxu0 0.0
        %883 = vmatpush1.msra.mxu0 %v848
        %884 = vmatprep.subr.mxu0 0.0
        %885 = vmatpush1.msra.mxu0 %v847
        %886 = vmatprep.subr.mxu0 0.0
        %887 = vmatpush1.msra.mxu0 %v846
        %888 = vmatprep.subr.mxu0 0.0
        %889 = vmatpush1.msra.mxu0 %v845
        %890 = vmatprep.subr.mxu0 0.0
        %891 = vmatpush1.msra.mxu0 %v844
        %892 = vmatprep.subr.mxu0 0.0
        %893 = vmatpush2.msra.mxu0 0.0
        %894 = vmatprep.subr.mxu0 0.0
        %895 = vmatpush2.msra.mxu0 0.0
        %896 = vmatprep.subr.mxu0 0.0
        %897 = vmatpush2.msra.mxu0 0.0
        %898 = vmatprep.subr.mxu0 0.0
        %899 = vmatpush2.msra.mxu0 0.0
        %900 = vmatprep.subr.mxu0 0.0
        %901 = vmatpush2.msra.mxu0 0.0
        %902 = vmatprep.subr.mxu0 0.0
        %903 = vmatpush2.msra.mxu0 0.0
        %904 = vmatprep.subr.mxu0 0.0
        %905 = vmatpush2.msra.mxu0 0.0
        %906 = vmatprep.subr.mxu0 0.0
        %907 = vmatpush2.msra.mxu0 0.0
        %908 = vmatprep.subr.mxu0 0.0
        %909 = vmatpush2.msra.mxu0 0.0
        %910 = vmatprep.subr.mxu0 0.0
        %911 = vmatpush2.msra.mxu0 0.0
        %912 = vmatprep.subr.mxu0 0.0
        %913 = vmatpush2.msra.mxu0 0.0
        %914 = vmatprep.subr.mxu0 0.0
        %915 = vmatpush2.msra.mxu0 0.0
        %916 = vmatprep.subr.mxu0 0.0
        %917 = vmatpush2.msra.mxu0 0.0
        %918 = vmatprep.subr.mxu0 0.0
        %919 = vmatpush2.msra.mxu0 0.0
        %920 = vmatprep.subr.mxu0 0.0
        %921 = vmatpush2.msra.mxu0 0.0
        %922 = vmatprep.subr.mxu0 0.0
        %923 = vmatpush2.msra.mxu0 0.0
        %924 = vmatprep.mubr.f32.mxu0 0.0
        %925 = vmatmul.mubr.f32.gmra.mxu0 %v812
        %v926 = vpop.f32.mrf.mxu0
        %v927 = vadd.f32 0.0, %v926
        %v928 = vpop.f32.mrf.mxu0
        %929 = vmatprep.mubr.f32.mxu0 0.0
        %930 = vmatmul.mubr.f32.gmra.mxu0 %v813
        %v931 = vpop.f32.mrf.mxu0
        %v932 = vadd.f32 0.0, %v931
        %v933 = vpop.f32.mrf.mxu0
        %934 = vmatprep.mubr.f32.mxu0 0.0
        %935 = vmatmul.mubr.f32.gmra.mxu0 %v814
        %v936 = vpop.f32.mrf.mxu0
        %v937 = vadd.f32 0.0, %v936
        %v938 = vpop.f32.mrf.mxu0
        %939 = vmatprep.mubr.f32.mxu0 0.0
        %940 = vmatmul.mubr.f32.gmra.mxu0 %v815
        %v941 = vpop.f32.mrf.mxu0
        %v942 = vadd.f32 0.0, %v941
        %v943 = vpop.f32.mrf.mxu0
        %944 = vmatprep.mubr.f32.mxu0 0.0
        %945 = vmatmul.mubr.f32.gmra.mxu0 %v816
        %v946 = vpop.f32.mrf.mxu0
        %v947 = vadd.f32 0.0, %v946
        %v948 = vpop.f32.mrf.mxu0
        %949 = vmatprep.mubr.f32.mxu0 0.0
        %950 = vmatmul.mubr.f32.gmra.mxu0 %v817
        %v951 = vpop.f32.mrf.mxu0
        %v952 = vadd.f32 0.0, %v951
        %v953 = vpop.f32.mrf.mxu0
        %954 = vmatprep.mubr.f32.mxu0 0.0
        %955 = vmatmul.mubr.f32.gmra.mxu0 %v818
        %v956 = vpop.f32.mrf.mxu0
        %v957 = vadd.f32 0.0, %v956
        %v958 = vpop.f32.mrf.mxu0
        %959 = vmatprep.mubr.f32.mxu0 0.0
        %960 = vmatmul.mubr.f32.gmra.mxu0 %v819
        %v961 = vpop.f32.mrf.mxu0
        %v962 = vadd.f32 0.0, %v961
        %v963 = vpop.f32.mrf.mxu0
        %964 = vmatprep.mubr.f32.mxu0 0.0
        %965 = vmatmul.mubr.f32.gmra.mxu0 %v820
        %v966 = vpop.f32.mrf.mxu0
        %v967 = vadd.f32 0.0, %v966
        %v968 = vpop.f32.mrf.mxu0
        %969 = vmatprep.mubr.f32.mxu0 0.0
        %970 = vmatmul.mubr.f32.gmra.mxu0 %v821
        %v971 = vpop.f32.mrf.mxu0
        %v972 = vadd.f32 0.0, %v971
        %v973 = vpop.f32.mrf.mxu0
        %974 = vmatprep.mubr.f32.mxu0 0.0
        %975 = vmatmul.mubr.f32.gmra.mxu0 %v822
        %v976 = vpop.f32.mrf.mxu0
        %v977 = vadd.f32 0.0, %v976
        %v978 = vpop.f32.mrf.mxu0
        %979 = vmatprep.mubr.f32.mxu0 0.0
        %980 = vmatmul.mubr.f32.gmra.mxu0 %v823
        %v981 = vpop.f32.mrf.mxu0
        %v982 = vadd.f32 0.0, %v981
        %v983 = vpop.f32.mrf.mxu0
        %984 = vmatprep.mubr.f32.mxu0 0.0
        %985 = vmatmul.mubr.f32.gmra.mxu0 %v824
        %v986 = vpop.f32.mrf.mxu0
        %v987 = vadd.f32 0.0, %v986
        %v988 = vpop.f32.mrf.mxu0
        %989 = vmatprep.mubr.f32.mxu0 0.0
        %990 = vmatmul.mubr.f32.gmra.mxu0 %v825
        %v991 = vpop.f32.mrf.mxu0
        %v992 = vadd.f32 0.0, %v991
        %v993 = vpop.f32.mrf.mxu0
        %994 = vmatprep.mubr.f32.mxu0 0.0
        %995 = vmatmul.mubr.f32.gmra.mxu0 %v826
        %v996 = vpop.f32.mrf.mxu0
        %v997 = vadd.f32 0.0, %v996
        %v998 = vpop.f32.mrf.mxu0
        %999 = vmatprep.mubr.f32.mxu0 0.0
        %1000 = vmatmul.mubr.f32.gmra.mxu0 %v827
        %v1001 = vpop.f32.mrf.mxu0
        %v1002 = vadd.f32 0.0, %v1001
        %v1003 = vpop.f32.mrf.mxu0
        %1004 = vdwg.mxu0
        %1005 = vmatprep.subr.mxu0 0.0
        %1006 = vmatpush1.msra.mxu0 %v843
        %1007 = vmatprep.subr.mxu0 0.0
        %1008 = vmatpush1.msra.mxu0 %v842
        %1009 = vmatprep.subr.mxu0 0.0
        %1010 = vmatpush1.msra.mxu0 %v841
        %1011 = vmatprep.subr.mxu0 0.0
        %1012 = vmatpush1.msra.mxu0 %v840
        %1013 = vmatprep.subr.mxu0 0.0
        %1014 = vmatpush1.msra.mxu0 %v839
        %1015 = vmatprep.subr.mxu0 0.0
        %1016 = vmatpush1.msra.mxu0 %v838
        %1017 = vmatprep.subr.mxu0 0.0
        %1018 = vmatpush1.msra.mxu0 %v837
        %1019 = vmatprep.subr.mxu0 0.0
        %1020 = vmatpush1.msra.mxu0 %v836
        %1021 = vmatprep.subr.mxu0 0.0
        %1022 = vmatpush1.msra.mxu0 %v835
        %1023 = vmatprep.subr.mxu0 0.0
        %1024 = vmatpush1.msra.mxu0 %v834
        %1025 = vmatprep.subr.mxu0 0.0
        %1026 = vmatpush1.msra.mxu0 %v833
        %1027 = vmatprep.subr.mxu0 0.0
        %1028 = vmatpush1.msra.mxu0 %v832
        %1029 = vmatprep.subr.mxu0 0.0
        %1030 = vmatpush1.msra.mxu0 %v831
        %1031 = vmatprep.subr.mxu0 0.0
        %1032 = vmatpush1.msra.mxu0 %v830
        %1033 = vmatprep.subr.mxu0 0.0
        %1034 = vmatpush1.msra.mxu0 %v829
        %1035 = vmatprep.subr.mxu0 0.0
        %1036 = vmatpush1.msra.mxu0 %v828
        %1037 = vmatprep.subr.mxu0 0.0
        %1038 = vmatpush2.msra.mxu0 0.0
        %1039 = vmatprep.subr.mxu0 0.0
        %1040 = vmatpush2.msra.mxu0 0.0
        %1041 = vmatprep.subr.mxu0 0.0
        %1042 = vmatpush2.msra.mxu0 0.0
        %1043 = vmatprep.subr.mxu0 0.0
        %1044 = vmatpush2.msra.mxu0 0.0
        %1045 = vmatprep.subr.mxu0 0.0
        %1046 = vmatpush2.msra.mxu0 0.0
        %1047 = vmatprep.subr.mxu0 0.0
        %1048 = vmatpush2.msra.mxu0 0.0
        %1049 = vmatprep.subr.mxu0 0.0
        %1050 = vmatpush2.msra.mxu0 0.0
        %1051 = vmatprep.subr.mxu0 0.0
        %1052 = vmatpush2.msra.mxu0 0.0
        %1053 = vmatprep.subr.mxu0 0.0
        %1054 = vmatpush2.msra.mxu0 0.0
        %1055 = vmatprep.subr.mxu0 0.0
        %1056 = vmatpush2.msra.mxu0 0.0
        %1057 = vmatprep.subr.mxu0 0.0
        %1058 = vmatpush2.msra.mxu0 0.0
        %1059 = vmatprep.subr.mxu0 0.0
        %1060 = vmatpush2.msra.mxu0 0.0
        %1061 = vmatprep.subr.mxu0 0.0
        %1062 = vmatpush2.msra.mxu0 0.0
        %1063 = vmatprep.subr.mxu0 0.0
        %1064 = vmatpush2.msra.mxu0 0.0
        %1065 = vmatprep.subr.mxu0 0.0
        %1066 = vmatpush2.msra.mxu0 0.0
        %1067 = vmatprep.subr.mxu0 0.0
        %1068 = vmatpush2.msra.mxu0 0.0
        %1069 = vmatprep.mubr.f32.mxu0 0.0
        %1070 = vmatmul.mubr.f32.gmra.mxu0 %v777
        %v1071 = vpop.f32.mrf.mxu0
        %v1072 = vadd.f32 %v927, %v1071
        %v1073 = vpop.f32.mrf.mxu0
        %1074 = vmatprep.mubr.f32.mxu0 0.0
        %1075 = vmatmul.mubr.f32.gmra.mxu0 %v778
        %v1076 = vpop.f32.mrf.mxu0
        %v1077 = vadd.f32 %v932, %v1076
        %v1078 = vpop.f32.mrf.mxu0
        %1079 = vmatprep.mubr.f32.mxu0 0.0
        %1080 = vmatmul.mubr.f32.gmra.mxu0 %v779
        %v1081 = vpop.f32.mrf.mxu0
        %v1082 = vadd.f32 %v937, %v1081
        %v1083 = vpop.f32.mrf.mxu0
        %1084 = vmatprep.mubr.f32.mxu0 0.0
        %1085 = vmatmul.mubr.f32.gmra.mxu0 %v780
        %v1086 = vpop.f32.mrf.mxu0
        %v1087 = vadd.f32 %v942, %v1086
        %v1088 = vpop.f32.mrf.mxu0
        %1089 = vmatprep.mubr.f32.mxu0 0.0
        %1090 = vmatmul.mubr.f32.gmra.mxu0 %v781
        %v1091 = vpop.f32.mrf.mxu0
        %v1092 = vadd.f32 %v947, %v1091
        %v1093 = vpop.f32.mrf.mxu0
        %1094 = vmatprep.mubr.f32.mxu0 0.0
        %1095 = vmatmul.mubr.f32.gmra.mxu0 %v782
        %v1096 = vpop.f32.mrf.mxu0
        %v1097 = vadd.f32 %v952, %v1096
        %v1098 = vpop.f32.mrf.mxu0
        %1099 = vmatprep.mubr.f32.mxu0 0.0
        %1100 = vmatmul.mubr.f32.gmra.mxu0 %v783
        %v1101 = vpop.f32.mrf.mxu0
        %v1102 = vadd.f32 %v957, %v1101
        %v1103 = vpop.f32.mrf.mxu0
        %1104 = vmatprep.mubr.f32.mxu0 0.0
        %1105 = vmatmul.mubr.f32.gmra.mxu0 %v784
        %v1106 = vpop.f32.mrf.mxu0
        %v1107 = vadd.f32 %v962, %v1106
        %v1108 = vpop.f32.mrf.mxu0
        %1109 = vmatprep.mubr.f32.mxu0 0.0
        %1110 = vmatmul.mubr.f32.gmra.mxu0 %v785
        %v1111 = vpop.f32.mrf.mxu0
        %v1112 = vadd.f32 %v967, %v1111
        %v1113 = vpop.f32.mrf.mxu0
        %1114 = vmatprep.mubr.f32.mxu0 0.0
        %1115 = vmatmul.mubr.f32.gmra.mxu0 %v786
        %v1116 = vpop.f32.mrf.mxu0
        %v1117 = vadd.f32 %v972, %v1116
        %v1118 = vpop.f32.mrf.mxu0
        %1119 = vmatprep.mubr.f32.mxu0 0.0
        %1120 = vmatmul.mubr.f32.gmra.mxu0 %v787
        %v1121 = vpop.f32.mrf.mxu0
        %v1122 = vadd.f32 %v977, %v1121
        %v1123 = vpop.f32.mrf.mxu0
        %1124 = vmatprep.mubr.f32.mxu0 0.0
        %1125 = vmatmul.mubr.f32.gmra.mxu0 %v788
        %v1126 = vpop.f32.mrf.mxu0
        %v1127 = vadd.f32 %v982, %v1126
        %v1128 = vpop.f32.mrf.mxu0
        %1129 = vmatprep.mubr.f32.mxu0 0.0
        %1130 = vmatmul.mubr.f32.gmra.mxu0 %v789
        %v1131 = vpop.f32.mrf.mxu0
        %v1132 = vadd.f32 %v987, %v1131
        %v1133 = vpop.f32.mrf.mxu0
        %1134 = vmatprep.mubr.f32.mxu0 0.0
        %1135 = vmatmul.mubr.f32.gmra.mxu0 %v790
        %v1136 = vpop.f32.mrf.mxu0
        %v1137 = vadd.f32 %v992, %v1136
        %v1138 = vpop.f32.mrf.mxu0
        %1139 = vmatprep.mubr.f32.mxu0 0.0
        %1140 = vmatmul.mubr.f32.gmra.mxu0 %v791
        %v1141 = vpop.f32.mrf.mxu0
        %v1142 = vadd.f32 %v997, %v1141
        %v1143 = vpop.f32.mrf.mxu0
        %1144 = vmatprep.mubr.f32.mxu0 0.0
        %1145 = vmatmul.mubr.f32.gmra.mxu0 %v792
        %v1146 = vpop.f32.mrf.mxu0
        %v1147 = vadd.f32 %v1002, %v1146
        %v1148 = vpop.f32.mrf.mxu0
        %1149 = vdwg.mxu0
        %v1150 = vld [vmem:[%s365] sm:$0x1]
        %v1152 = vlaneseq
        %v1153 = vshrl.u32 %v1152, 7
        %v1154 = vsub.s32 0, %v1153
        %v1155 = vrot.slane %v1150, %v1154
        %v1157 = vadd.f32 %v1072, %v1155
        %v1158 = vadd.f32 %v1077, %v1155
        %v1159 = vadd.f32 %v1082, %v1155
        %v1160 = vadd.f32 %v1087, %v1155
        %v1161 = vadd.f32 %v1092, %v1155
        %v1162 = vadd.f32 %v1097, %v1155
        %v1163 = vadd.f32 %v1102, %v1155
        %v1164 = vadd.f32 %v1107, %v1155
        %v1165 = vadd.f32 %v1112, %v1155
        %v1166 = vadd.f32 %v1117, %v1155
        %v1167 = vadd.f32 %v1122, %v1155
        %v1168 = vadd.f32 %v1127, %v1155
        %v1169 = vadd.f32 %v1132, %v1155
        %v1170 = vadd.f32 %v1137, %v1155
        %v1171 = vadd.f32 %v1142, %v1155
        %v1172 = vadd.f32 %v1147, %v1155
        %v1173 = vmul.f32 %v1157, %v1157
        %v1174 = vmul.f32 %v1158, %v1158
        %v1175 = vmul.f32 %v1159, %v1159
        %v1176 = vmul.f32 %v1160, %v1160
        %v1177 = vmul.f32 %v1161, %v1161
        %v1178 = vmul.f32 %v1162, %v1162
        %v1179 = vmul.f32 %v1163, %v1163
        %v1180 = vmul.f32 %v1164, %v1164
        %v1181 = vmul.f32 %v1165, %v1165
        %v1182 = vmul.f32 %v1166, %v1166
        %v1183 = vmul.f32 %v1167, %v1167
        %v1184 = vmul.f32 %v1168, %v1168
        %v1185 = vmul.f32 %v1169, %v1169
        %v1186 = vmul.f32 %v1170, %v1170
        %v1187 = vmul.f32 %v1171, %v1171
        %v1188 = vmul.f32 %v1172, %v1172
        %1189 = vadd.xlane.f32.xlu0 %v1173
        %v1190 = vpop.xlane.xlu0 %1189
        %1191 = vadd.xlane.f32.xlu0 %v1174
        %v1192 = vpop.xlane.xlu0 %1191
        %1193 = vadd.xlane.f32.xlu0 %v1175
        %v1194 = vpop.xlane.xlu0 %1193
        %1195 = vadd.xlane.f32.xlu0 %v1176
        %v1196 = vpop.xlane.xlu0 %1195
        %1197 = vadd.xlane.f32.xlu0 %v1177
        %v1198 = vpop.xlane.xlu0 %1197
        %1199 = vadd.xlane.f32.xlu0 %v1178
        %v1200 = vpop.xlane.xlu0 %1199
        %1201 = vadd.xlane.f32.xlu0 %v1179
        %v1202 = vpop.xlane.xlu0 %1201
        %1203 = vadd.xlane.f32.xlu0 %v1180
        %v1204 = vpop.xlane.xlu0 %1203
        %1205 = vadd.xlane.f32.xlu0 %v1181
        %v1206 = vpop.xlane.xlu0 %1205
        %1207 = vadd.xlane.f32.xlu0 %v1182
        %v1208 = vpop.xlane.xlu0 %1207
        %1209 = vadd.xlane.f32.xlu0 %v1183
        %v1210 = vpop.xlane.xlu0 %1209
        %1211 = vadd.xlane.f32.xlu0 %v1184
        %v1212 = vpop.xlane.xlu0 %1211
        %1213 = vadd.xlane.f32.xlu0 %v1185
        %v1214 = vpop.xlane.xlu0 %1213
        %1215 = vadd.xlane.f32.xlu0 %v1186
        %v1216 = vpop.xlane.xlu0 %1215
        %1217 = vadd.xlane.f32.xlu0 %v1187
        %v1218 = vpop.xlane.xlu0 %1217
        %1219 = vadd.xlane.f32.xlu0 %v1188
        %v1220 = vpop.xlane.xlu0 %1219
        %v1221 = vmax.f32 %v1190, 1e-24
        %v1222 = vmax.f32 %v1192, 1e-24
        %v1223 = vmax.f32 %v1194, 1e-24
        %v1224 = vmax.f32 %v1196, 1e-24
        %v1225 = vmax.f32 %v1198, 1e-24
        %v1226 = vmax.f32 %v1200, 1e-24
        %v1227 = vmax.f32 %v1202, 1e-24
        %v1228 = vmax.f32 %v1204, 1e-24
        %v1229 = vmax.f32 %v1206, 1e-24
        %v1230 = vmax.f32 %v1208, 1e-24
        %v1231 = vmax.f32 %v1210, 1e-24
        %v1232 = vmax.f32 %v1212, 1e-24
        %v1233 = vmax.f32 %v1214, 1e-24
        %v1234 = vmax.f32 %v1216, 1e-24
        %v1235 = vmax.f32 %v1218, 1e-24
        %v1236 = vmax.f32 %v1220, 1e-24
        %v1237 = vrsqrt.pop %v1221
        %v1238 = vrsqrt.pop %v1222
        %v1239 = vrsqrt.pop %v1223
        %v1240 = vrsqrt.pop %v1224
        %v1241 = vrsqrt.pop %v1225
        %v1242 = vrsqrt.pop %v1226
        %v1243 = vrsqrt.pop %v1227
        %v1244 = vrsqrt.pop %v1228
        %v1245 = vrsqrt.pop %v1229
        %v1246 = vrsqrt.pop %v1230
        %v1247 = vrsqrt.pop %v1231
        %v1248 = vrsqrt.pop %v1232
        %v1249 = vrsqrt.pop %v1233
        %v1250 = vrsqrt.pop %v1234
        %v1251 = vrsqrt.pop %v1235
        %v1252 = vrsqrt.pop %v1236
        %v1253 = vmul.f32 %v1157, %v1237
        %v1254 = vmul.f32 %v1158, %v1238
        %v1255 = vmul.f32 %v1159, %v1239
        %v1256 = vmul.f32 %v1160, %v1240
        %v1257 = vmul.f32 %v1161, %v1241
        %v1258 = vmul.f32 %v1162, %v1242
        %v1259 = vmul.f32 %v1163, %v1243
        %v1260 = vmul.f32 %v1164, %v1244
        %v1261 = vmul.f32 %v1165, %v1245
        %v1262 = vmul.f32 %v1166, %v1246
        %v1263 = vmul.f32 %v1167, %v1247
        %v1264 = vmul.f32 %v1168, %v1248
        %v1265 = vmul.f32 %v1169, %v1249
        %v1266 = vmul.f32 %v1170, %v1250
        %v1267 = vmul.f32 %v1171, %v1251
        %v1268 = vmul.f32 %v1172, %v1252
        %v1269 = vpack.c.bf16 %v1254, %v1253
        %v1270 = vpack.c.bf16 %v1256, %v1255
        %v1271 = vpack.c.bf16 %v1258, %v1257
        %v1272 = vpack.c.bf16 %v1260, %v1259
        %v1273 = vpack.c.bf16 %v1262, %v1261
        %v1274 = vpack.c.bf16 %v1264, %v1263
        %v1275 = vpack.c.bf16 %v1266, %v1265
        %v1276 = vpack.c.bf16 %v1268, %v1267
        %v1285 = vunpack.c.l.b16 %v1269
        %v1286 = vunpack.c.h.b16 %v1269
        %v1287 = vunpack.c.l.b16 %v1270
        %v1288 = vunpack.c.h.b16 %v1270
        %v1289 = vunpack.c.l.b16 %v1271
        %v1290 = vunpack.c.h.b16 %v1271
        %v1291 = vunpack.c.l.b16 %v1272
        %v1292 = vunpack.c.h.b16 %v1272
        %v1293 = vunpack.c.l.b16 %v1273
        %v1294 = vunpack.c.h.b16 %v1273
        %v1295 = vunpack.c.l.b16 %v1274
        %v1296 = vunpack.c.h.b16 %v1274
        %v1297 = vunpack.c.l.b16 %v1275
        %v1298 = vunpack.c.h.b16 %v1275
        %v1299 = vunpack.c.l.b16 %v1276
        %v1300 = vunpack.c.h.b16 %v1276
        %v1301 = vpack.c.b16 %v1285, %v1285
        %v1302 = vpack.c.b16 %v1286, %v1286
        %v1303 = vpack.c.b16 %v1287, %v1287
        %v1304 = vpack.c.b16 %v1288, %v1288
        %v1305 = vpack.c.b16 %v1289, %v1289
        %v1306 = vpack.c.b16 %v1290, %v1290
        %v1307 = vpack.c.b16 %v1291, %v1291
        %v1308 = vpack.c.b16 %v1292, %v1292
        %v1309 = vpack.c.b16 %v1293, %v1293
        %v1310 = vpack.c.b16 %v1294, %v1294
        %v1311 = vpack.c.b16 %v1295, %v1295
        %v1312 = vpack.c.b16 %v1296, %v1296
        %v1313 = vpack.c.b16 %v1297, %v1297
        %v1314 = vpack.c.b16 %v1298, %v1298
        %v1315 = vpack.c.b16 %v1299, %v1299
        %v1316 = vpack.c.b16 %v1300, %v1300
        %s1333 = smul.u32 %s446, 16
        %s1334 = sadd.s32 %s467, %s1333
        %s1335 = smul.addr %s1334, 4
        %s1336 = scalar_lea.vmem [#allocation2], %s1335
        %1337 = vst [vmem:[%s1336] sm:$0xf] %v1301
        %1338 = vst [vmem:[%s1336 + $0x4] sm:$0xf] %v1302
        %1339 = vst [vmem:[%s1336 + $0x8] sm:$0xf] %v1303
        %1340 = vst [vmem:[%s1336 + $0xc] sm:$0xf] %v1304
        %1341 = vst [vmem:[%s1336 + $0x10] sm:$0xf] %v1305
        %1342 = vst [vmem:[%s1336 + $0x14] sm:$0xf] %v1306
        %1343 = vst [vmem:[%s1336 + $0x18] sm:$0xf] %v1307
        %1344 = vst [vmem:[%s1336 + $0x1c] sm:$0xf] %v1308
        %1345 = vst [vmem:[%s1336 + $0x20] sm:$0xf] %v1309
        %1346 = vst [vmem:[%s1336 + $0x24] sm:$0xf] %v1310
        %1347 = vst [vmem:[%s1336 + $0x28] sm:$0xf] %v1311
        %1348 = vst [vmem:[%s1336 + $0x2c] sm:$0xf] %v1312
        %1349 = vst [vmem:[%s1336 + $0x30] sm:$0xf] %v1313
        %1350 = vst [vmem:[%s1336 + $0x34] sm:$0xf] %v1314
        %1351 = vst [vmem:[%s1336 + $0x38] sm:$0xf] %v1315
        %1352 = vst [vmem:[%s1336 + $0x3c] sm:$0xf] %v1316
        %p1353 = scmp.eq.s32.totalorder %s26, 1
        %p1354 = pnand %p1353, %p368
        %p1355 = pneg %p1354
        // Predicated region
        $region95: #{sage_forward.1} parent=55 // pred_check
          _
        $region96: #{sage_forward.1} parent=55 // pred_check_branch
          %1357 = sbr.rel (%p1354) target = $region98
        $region97: #{sage_forward.1} parent=55 // pred_region
          %v1358 = vld [vmem:[#allocation2] sm:$0xf]
          %v1359 = vld [vmem:[#allocation2 + $0x4] sm:$0xf]
          %v1360 = vld [vmem:[#allocation2 + $0x8] sm:$0xf]
          %v1361 = vld [vmem:[#allocation2 + $0xc] sm:$0xf]
          %v1362 = vld [vmem:[#allocation2 + $0x10] sm:$0xf]
          %v1363 = vld [vmem:[#allocation2 + $0x14] sm:$0xf]
          %v1364 = vld [vmem:[#allocation2 + $0x18] sm:$0xf]
          %v1365 = vld [vmem:[#allocation2 + $0x1c] sm:$0xf]
          %v1366 = vld [vmem:[#allocation2 + $0x20] sm:$0xf]
          %v1367 = vld [vmem:[#allocation2 + $0x24] sm:$0xf]
          %v1368 = vld [vmem:[#allocation2 + $0x28] sm:$0xf]
          %v1369 = vld [vmem:[#allocation2 + $0x2c] sm:$0xf]
          %v1370 = vld [vmem:[#allocation2 + $0x30] sm:$0xf]
          %v1371 = vld [vmem:[#allocation2 + $0x34] sm:$0xf]
          %v1372 = vld [vmem:[#allocation2 + $0x38] sm:$0xf]
          %v1373 = vld [vmem:[#allocation2 + $0x3c] sm:$0xf]
          %v1374 = vunpack.c.l.bf16 %v1358
          %v1375 = vunpack.c.l.bf16 %v1359
          %v1376 = vunpack.c.l.bf16 %v1360
          %v1377 = vunpack.c.l.bf16 %v1361
          %v1378 = vunpack.c.l.bf16 %v1362
          %v1379 = vunpack.c.l.bf16 %v1363
          %v1380 = vunpack.c.l.bf16 %v1364
          %v1381 = vunpack.c.l.bf16 %v1365
          %v1382 = vunpack.c.l.bf16 %v1366
          %v1383 = vunpack.c.l.bf16 %v1367
          %v1384 = vunpack.c.l.bf16 %v1368
          %v1385 = vunpack.c.l.bf16 %v1369
          %v1386 = vunpack.c.l.bf16 %v1370
          %v1387 = vunpack.c.l.bf16 %v1371
          %v1388 = vunpack.c.l.bf16 %v1372
          %v1389 = vunpack.c.l.bf16 %v1373
          %v1390 = vlaneseq
          %v1391 = vshrl.u32 %v1390, 7
          %v1392 = vadd.s32 %v1391, 8
          %v1393 = vadd.s32 %v1391, 16
          %v1394 = vadd.s32 %v1391, 24
          %v1395 = vadd.s32 %v1391, 32
          %v1396 = vadd.s32 %v1391, 40
          %v1397 = vadd.s32 %v1391, 48
          %v1398 = vadd.s32 %v1391, 56
          %v1399 = vadd.s32 %v1391, 64
          %v1400 = vadd.s32 %v1391, 72
          %v1401 = vadd.s32 %v1391, 80
          %v1402 = vadd.s32 %v1391, 88
          %v1403 = vadd.s32 %v1391, 96
          %v1404 = vadd.s32 %v1391, 104
          %v1405 = vadd.s32 %v1391, 112
          %v1406 = vadd.s32 %v1391, 120
          %vm1407 = vcmp.lt.s32.totalorder %v1391, 16
          %vm1408 = vcmp.lt.s32.totalorder %v1392, 16
          %vm1409 = vcmp.lt.s32.totalorder %v1393, 16
          %vm1410 = vcmp.lt.s32.totalorder %v1394, 16
          %vm1411 = vcmp.lt.s32.totalorder %v1395, 16
          %vm1412 = vcmp.lt.s32.totalorder %v1396, 16
          %vm1413 = vcmp.lt.s32.totalorder %v1397, 16
          %vm1414 = vcmp.lt.s32.totalorder %v1398, 16
          %vm1415 = vcmp.lt.s32.totalorder %v1399, 16
          %vm1416 = vcmp.lt.s32.totalorder %v1400, 16
          %vm1417 = vcmp.lt.s32.totalorder %v1401, 16
          %vm1418 = vcmp.lt.s32.totalorder %v1402, 16
          %vm1419 = vcmp.lt.s32.totalorder %v1403, 16
          %vm1420 = vcmp.lt.s32.totalorder %v1404, 16
          %vm1421 = vcmp.lt.s32.totalorder %v1405, 16
          %vm1422 = vcmp.lt.s32.totalorder %v1406, 16
          %v1423 = vsel %vm1407, 1, 0
          %v1424 = vsel %vm1408, 1, 0
          %v1425 = vsel %vm1409, 1, 0
          %v1426 = vsel %vm1410, 1, 0
          %v1427 = vsel %vm1411, 1, 0
          %v1428 = vsel %vm1412, 1, 0
          %v1429 = vsel %vm1413, 1, 0
          %v1430 = vsel %vm1414, 1, 0
          %v1431 = vsel %vm1415, 1, 0
          %v1432 = vsel %vm1416, 1, 0
          %v1433 = vsel %vm1417, 1, 0
          %v1434 = vsel %vm1418, 1, 0
          %v1435 = vsel %vm1419, 1, 0
          %v1436 = vsel %vm1420, 1, 0
          %v1437 = vsel %vm1421, 1, 0
          %v1438 = vsel %vm1422, 1, 0
          %v1439 = vcvt.s32.f32 %v1423
          %v1440 = vcvt.s32.f32 %v1424
          %v1441 = vcvt.s32.f32 %v1425
          %v1442 = vcvt.s32.f32 %v1426
          %v1443 = vcvt.s32.f32 %v1427
          %v1444 = vcvt.s32.f32 %v1428
          %v1445 = vcvt.s32.f32 %v1429
          %v1446 = vcvt.s32.f32 %v1430
          %v1447 = vcvt.s32.f32 %v1431
          %v1448 = vcvt.s32.f32 %v1432
          %v1449 = vcvt.s32.f32 %v1433
          %v1450 = vcvt.s32.f32 %v1434
          %v1451 = vcvt.s32.f32 %v1435
          %v1452 = vcvt.s32.f32 %v1436
          %v1453 = vcvt.s32.f32 %v1437
          %v1454 = vcvt.s32.f32 %v1438
          %v1455 = vmul.f32 %v1374, %v1439
          %v1456 = vmul.f32 %v1375, %v1440
          %v1457 = vmul.f32 %v1376, %v1441
          %v1458 = vmul.f32 %v1377, %v1442
          %v1459 = vmul.f32 %v1378, %v1443
          %v1460 = vmul.f32 %v1379, %v1444
          %v1461 = vmul.f32 %v1380, %v1445
          %v1462 = vmul.f32 %v1381, %v1446
          %v1463 = vmul.f32 %v1382, %v1447
          %v1464 = vmul.f32 %v1383, %v1448
          %v1465 = vmul.f32 %v1384, %v1449
          %v1466 = vmul.f32 %v1385, %v1450
          %v1467 = vmul.f32 %v1386, %v1451
          %v1468 = vmul.f32 %v1387, %v1452
          %v1469 = vmul.f32 %v1388, %v1453
          %v1470 = vmul.f32 %v1389, %v1454
          %v1471 = vadd.f32 %v1455, %v1456
          %v1472 = vadd.f32 %v1471, %v1457
          %v1473 = vadd.f32 %v1472, %v1458
          %v1474 = vadd.f32 %v1473, %v1459
          %v1475 = vadd.f32 %v1474, %v1460
          %v1476 = vadd.f32 %v1475, %v1461
          %v1477 = vadd.f32 %v1476, %v1462
          %v1478 = vadd.f32 %v1477, %v1463
          %v1479 = vadd.f32 %v1478, %v1464
          %v1480 = vadd.f32 %v1479, %v1465
          %v1481 = vadd.f32 %v1480, %v1466
          %v1482 = vadd.f32 %v1481, %v1467
          %v1483 = vadd.f32 %v1482, %v1468
          %v1484 = vadd.f32 %v1483, %v1469
          %v1485 = vadd.f32 %v1484, %v1470
          %v1486 = vrot.slane %v1485, 4
          %v1487 = vadd.f32 %v1485, %v1486
          %v1488 = vrot.slane %v1487, 2
          %v1489 = vadd.f32 %v1487, %v1488
          %v1490 = vrot.slane %v1489, 1
          %v1491 = vadd.f32 %v1489, %v1490
          %v1492 = vmul.f32 %v1491, 0.0625
          %v1493 = vld [vmem:[%s6] sm:$0xff]
          %v1494 = vld [vmem:[%s6 + $0x8] sm:$0xff]
          %v1495 = vld [vmem:[%s6 + $0x10] sm:$0xff]
          %v1496 = vld [vmem:[%s6 + $0x18] sm:$0xff]
          %v1497 = vld [vmem:[%s6 + $0x20] sm:$0xff]
          %v1498 = vld [vmem:[%s6 + $0x28] sm:$0xff]
          %v1499 = vld [vmem:[%s6 + $0x30] sm:$0xff]
          %v1500 = vld [vmem:[%s6 + $0x38] sm:$0xff]
          %v1501 = vld [vmem:[%s6 + $0x40] sm:$0xff]
          %v1502 = vld [vmem:[%s6 + $0x48] sm:$0xff]
          %v1503 = vld [vmem:[%s6 + $0x50] sm:$0xff]
          %v1504 = vld [vmem:[%s6 + $0x58] sm:$0xff]
          %v1505 = vld [vmem:[%s6 + $0x60] sm:$0xff]
          %v1506 = vld [vmem:[%s6 + $0x68] sm:$0xff]
          %v1507 = vld [vmem:[%s6 + $0x70] sm:$0xff]
          %v1508 = vld [vmem:[%s6 + $0x78] sm:$0xff]
          %v1509 = vld [vmem:[%s7] sm:$0x1]
          %1510 = vmatprep.subr.mxu0 0.0
          %1511 = vmatpush1.msra.mxu0 %v1508
          %1512 = vmatprep.subr.mxu0 0.0
          %1513 = vmatpush1.msra.mxu0 %v1507
          %1514 = vmatprep.subr.mxu0 0.0
          %1515 = vmatpush1.msra.mxu0 %v1506
          %1516 = vmatprep.subr.mxu0 0.0
          %1517 = vmatpush1.msra.mxu0 %v1505
          %1518 = vmatprep.subr.mxu0 0.0
          %1519 = vmatpush1.msra.mxu0 %v1504
          %1520 = vmatprep.subr.mxu0 0.0
          %1521 = vmatpush1.msra.mxu0 %v1503
          %1522 = vmatprep.subr.mxu0 0.0
          %1523 = vmatpush1.msra.mxu0 %v1502
          %1524 = vmatprep.subr.mxu0 0.0
          %1525 = vmatpush1.msra.mxu0 %v1501
          %1526 = vmatprep.subr.mxu0 0.0
          %1527 = vmatpush1.msra.mxu0 %v1500
          %1528 = vmatprep.subr.mxu0 0.0
          %1529 = vmatpush1.msra.mxu0 %v1499
          %1530 = vmatprep.subr.mxu0 0.0
          %1531 = vmatpush1.msra.mxu0 %v1498
          %1532 = vmatprep.subr.mxu0 0.0
          %1533 = vmatpush1.msra.mxu0 %v1497
          %1534 = vmatprep.subr.mxu0 0.0
          %1535 = vmatpush1.msra.mxu0 %v1496
          %1536 = vmatprep.subr.mxu0 0.0
          %1537 = vmatpush1.msra.mxu0 %v1495
          %1538 = vmatprep.subr.mxu0 0.0
          %1539 = vmatpush1.msra.mxu0 %v1494
          %1540 = vmatprep.subr.mxu0 0.0
          %1541 = vmatpush1.msra.mxu0 %v1493
          %1542 = vmatprep.subr.mxu0 0.0
          %1543 = vmatpush2.msra.mxu0 0.0
          %1544 = vmatprep.subr.mxu0 0.0
          %1545 = vmatpush2.msra.mxu0 0.0
          %1546 = vmatprep.subr.mxu0 0.0
          %1547 = vmatpush2.msra.mxu0 0.0
          %1548 = vmatprep.subr.mxu0 0.0
          %1549 = vmatpush2.msra.mxu0 0.0
          %1550 = vmatprep.subr.mxu0 0.0
          %1551 = vmatpush2.msra.mxu0 0.0
          %1552 = vmatprep.subr.mxu0 0.0
          %1553 = vmatpush2.msra.mxu0 0.0
          %1554 = vmatprep.subr.mxu0 0.0
          %1555 = vmatpush2.msra.mxu0 0.0
          %1556 = vmatprep.subr.mxu0 0.0
          %1557 = vmatpush2.msra.mxu0 0.0
          %1558 = vmatprep.subr.mxu0 0.0
          %1559 = vmatpush2.msra.mxu0 0.0
          %1560 = vmatprep.subr.mxu0 0.0
          %1561 = vmatpush2.msra.mxu0 0.0
          %1562 = vmatprep.subr.mxu0 0.0
          %1563 = vmatpush2.msra.mxu0 0.0
          %1564 = vmatprep.subr.mxu0 0.0
          %1565 = vmatpush2.msra.mxu0 0.0
          %1566 = vmatprep.subr.mxu0 0.0
          %1567 = vmatpush2.msra.mxu0 0.0
          %1568 = vmatprep.subr.mxu0 0.0
          %1569 = vmatpush2.msra.mxu0 0.0
          %1570 = vmatprep.subr.mxu0 0.0
          %1571 = vmatpush2.msra.mxu0 0.0
          %1572 = vmatprep.subr.mxu0 0.0
          %1573 = vmatpush2.msra.mxu0 0.0
          %1574 = vmatprep.mubr.f32.mxu0 0.0
          %1575 = vmatmul.mubr.f32.gmra.mxu0 %v1492
          %v1576 = vpop.f32.mrf.mxu0
          %v1577 = vadd.f32 %v1509, %v1576
          %v1578 = vpop.f32.mrf.mxu0
          %1579 = vdwg.mxu0
          %v1580 = vmax.f32 %v1577, 0.0
          %v1581 = vld [vmem:[%s8] sm:$0xff]
          %v1582 = vld [vmem:[%s8 + $0x8] sm:$0xff]
          %v1583 = vld [vmem:[%s8 + $0x10] sm:$0xff]
          %v1584 = vld [vmem:[%s8 + $0x18] sm:$0xff]
          %v1585 = vld [vmem:[%s8 + $0x20] sm:$0xff]
          %v1586 = vld [vmem:[%s8 + $0x28] sm:$0xff]
          %v1587 = vld [vmem:[%s8 + $0x30] sm:$0xff]
          %v1588 = vld [vmem:[%s8 + $0x38] sm:$0xff]
          %v1589 = vld [vmem:[%s8 + $0x40] sm:$0xff]
          %v1590 = vld [vmem:[%s8 + $0x48] sm:$0xff]
          %v1591 = vld [vmem:[%s8 + $0x50] sm:$0xff]
          %v1592 = vld [vmem:[%s8 + $0x58] sm:$0xff]
          %v1593 = vld [vmem:[%s8 + $0x60] sm:$0xff]
          %v1594 = vld [vmem:[%s8 + $0x68] sm:$0xff]
          %v1595 = vld [vmem:[%s8 + $0x70] sm:$0xff]
          %v1596 = vld [vmem:[%s8 + $0x78] sm:$0xff]
          %v1597 = vld [vmem:[%s9] sm:$0x1]
          %1598 = vmatprep.subr.mxu0 0.0
          %1599 = vmatpush1.msra.mxu0 %v1596
          %1600 = vmatprep.subr.mxu0 0.0
          %1601 = vmatpush1.msra.mxu0 %v1595
          %1602 = vmatprep.subr.mxu0 0.0
          %1603 = vmatpush1.msra.mxu0 %v1594
          %1604 = vmatprep.subr.mxu0 0.0
          %1605 = vmatpush1.msra.mxu0 %v1593
          %1606 = vmatprep.subr.mxu0 0.0
          %1607 = vmatpush1.msra.mxu0 %v1592
          %1608 = vmatprep.subr.mxu0 0.0
          %1609 = vmatpush1.msra.mxu0 %v1591
          %1610 = vmatprep.subr.mxu0 0.0
          %1611 = vmatpush1.msra.mxu0 %v1590
          %1612 = vmatprep.subr.mxu0 0.0
          %1613 = vmatpush1.msra.mxu0 %v1589
          %1614 = vmatprep.subr.mxu0 0.0
          %1615 = vmatpush1.msra.mxu0 %v1588
          %1616 = vmatprep.subr.mxu0 0.0
          %1617 = vmatpush1.msra.mxu0 %v1587
          %1618 = vmatprep.subr.mxu0 0.0
          %1619 = vmatpush1.msra.mxu0 %v1586
          %1620 = vmatprep.subr.mxu0 0.0
          %1621 = vmatpush1.msra.mxu0 %v1585
          %1622 = vmatprep.subr.mxu0 0.0
          %1623 = vmatpush1.msra.mxu0 %v1584
          %1624 = vmatprep.subr.mxu0 0.0
          %1625 = vmatpush1.msra.mxu0 %v1583
          %1626 = vmatprep.subr.mxu0 0.0
          %1627 = vmatpush1.msra.mxu0 %v1582
          %1628 = vmatprep.subr.mxu0 0.0
          %1629 = vmatpush1.msra.mxu0 %v1581
          %1630 = vmatprep.subr.mxu0 0.0
          %1631 = vmatpush2.msra.mxu0 0.0
          %1632 = vmatprep.subr.mxu0 0.0
          %1633 = vmatpush2.msra.mxu0 0.0
          %1634 = vmatprep.subr.mxu0 0.0
          %1635 = vmatpush2.msra.mxu0 0.0
          %1636 = vmatprep.subr.mxu0 0.0
          %1637 = vmatpush2.msra.mxu0 0.0
          %1638 = vmatprep.subr.mxu0 0.0
          %1639 = vmatpush2.msra.mxu0 0.0
          %1640 = vmatprep.subr.mxu0 0.0
          %1641 = vmatpush2.msra.mxu0 0.0
          %1642 = vmatprep.subr.mxu0 0.0
          %1643 = vmatpush2.msra.mxu0 0.0
          %1644 = vmatprep.subr.mxu0 0.0
          %1645 = vmatpush2.msra.mxu0 0.0
          %1646 = vmatprep.subr.mxu0 0.0
          %1647 = vmatpush2.msra.mxu0 0.0
          %1648 = vmatprep.subr.mxu0 0.0
          %1649 = vmatpush2.msra.mxu0 0.0
          %1650 = vmatprep.subr.mxu0 0.0
          %1651 = vmatpush2.msra.mxu0 0.0
          %1652 = vmatprep.subr.mxu0 0.0
          %1653 = vmatpush2.msra.mxu0 0.0
          %1654 = vmatprep.subr.mxu0 0.0
          %1655 = vmatpush2.msra.mxu0 0.0
          %1656 = vmatprep.subr.mxu0 0.0
          %1657 = vmatpush2.msra.mxu0 0.0
          %1658 = vmatprep.subr.mxu0 0.0
          %1659 = vmatpush2.msra.mxu0 0.0
          %1660 = vmatprep.subr.mxu0 0.0
          %1661 = vmatpush2.msra.mxu0 0.0
          %1662 = vmatprep.mubr.f32.mxu0 0.0
          %1663 = vmatmul.mubr.f32.gmra.mxu0 %v1580
          %v1664 = vpop.f32.mrf.mxu0
          %v1665 = vadd.f32 %v1597, %v1664
          %v1666 = vpop.f32.mrf.mxu0
          %1667 = vdwg.mxu0
          %1668 = vst [vmem:[#allocation4] sm:$0x1] %v1665
        $region98: #{sage_forward.1} parent=55 // pred_fallthru
          _
        // Predicated region
        $region99: #{sage_forward.1} parent=55 // pred_check
          %p1669 = pneg %p251
        $region100: #{sage_forward.1} parent=55 // pred_check_branch
          %1671 = sbr.rel (%p1669) target = $region102
        $region101: #{sage_forward.1} parent=55 // pred_region
          %s1673 = ssub.s32 16, 16
          %1674 = vsyncadd [#allocation5], %s1673
          %s1676 = sshll.u32 [#allocation4], 4
          %s1677 = int_to_ptr.vmem [resolvable:$true] %s1676
          %1679 = dma.vmem_to_hbm [thread:$0]  %s1677, 16, %s10, [#allocation5]
        $region102: #{sage_forward.1} parent=55 // pred_fallthru
          _
        // Predicated region
        $region103: #{sage_forward.1} parent=55 // pred_check
          %p1680 = pneg %p251
        $region104: #{sage_forward.1} parent=55 // pred_check_branch
          %1682 = sbr.rel (%p1680) target = $region106
        $region105: #{sage_forward.1} parent=55 // pred_region
          %1683 = dma.done [#allocation5], 16
        $region106: #{sage_forward.1} parent=55 // pred_fallthru
          _
      $region56: #{sage_forward.1} parent=5 // pred_fallthru
        _
      %p1684 = scmp.le.s32.totalorder 2, %s17
      // Predicated region
      $region107: #{sage_forward.1} parent=5 // pred_check
        %p1685 = pneg %p1684
      $region108: #{sage_forward.1} parent=5 // pred_check_branch
        %1687 = sbr.rel (%p1685) target = $region110
      $region109: #{sage_forward.1} parent=5 // pred_region
        %s1688 = ssub.s32 %s17, 2
      $region110: #{sage_forward.1} parent=5 // pred_fallthru
        _
    $region6: #{sage_forward.1} parent=1 // loop_footer
      %s21 = sadd.s32 1, %s17
    $region7: #{sage_forward.1} parent=1 // loop_footer_branch
      %16 = sbr.rel target = $region3
    $region8: #{sage_forward.1} parent=1 // loop_exit
      _
    %1689 = vsyncpa [#allocation5], 1
    %s1690 = scalar_lea.sflag [#allocation5], 1
    %1691 = vsyncpa %s1690, 1
  %1692 = vsyncmov [#allocation3]
  %s1693 = vpop.sfrf %1692
  %p1694 = scmp.eq.s32.totalorder %s1693, 0
  %p1695 = pneg %p1694
  %1697 = shalt.err (%p1695)

</llo_original>
